<compile_context>
chip_gen: v5e
topology: v5e:2x2
jax: 0.10.0
libtpu: 0.0.40
codegen_flags: <defaults>
</compile_context>

<pallas_src>
import jax
import jax.numpy as jnp
from jax import lax
from jax.experimental import pallas as pl
from jax.experimental.pallas import tpu as pltpu


# -----------------------------------------------------------------------------
# small helpers
# -----------------------------------------------------------------------------
def _ceil_to(x, m):
    return ((x + m - 1) // m) * m


def _vmem_block_bytes(rows, cols, dtype):
    """Rough tile-padded VMEM footprint of a (rows, cols) block in `dtype`."""
    itemsize = jnp.dtype(dtype).itemsize
    sub = 32 // itemsize                    # (8,128) f32 tiles, (16,128) bf16 tiles
    return _ceil_to(max(rows, 1), sub) * _ceil_to(max(cols, 1), 128) * itemsize


def _pick_nb_tile(nb, per_image_bytes, *, target_step_bytes=2 << 20, min_steps=4):
    """Images per grid step: large enough to amortize the ~0.35us/step overhead,
    small enough to keep >= min_steps steps (v7x: both TensorCores busy) and a
    tiny VMEM footprint.  Always a divisor of nb (no ragged last block)."""
    best = 1
    for d in range(1, nb + 1):
        if nb % d != 0:
            continue
        if nb // d < min(min_steps, nb):
            continue
        if d > 1 and d * per_image_bytes > target_step_bytes:
            continue
        best = max(best, d)
    return best


# -----------------------------------------------------------------------------
# Parameter-setup glue (plain JAX): partial Tucker (modes [0,1], HOOI, SVD init)
# Runs ONCE at module init, never in the per-call forward path.
# -----------------------------------------------------------------------------
def _unfold(t, mode):
    return jnp.moveaxis(t, mode, 0).reshape(t.shape[mode], -1)


def _mode_dot(t, mat, mode):
    moved = jnp.moveaxis(t, mode, 0)
    out = jnp.tensordot(mat, moved, axes=([1], [0]))
    return jnp.moveaxis(out, 0, mode)


def _leading_svd(t, mode, rank):
    u, _, _ = jnp.linalg.svd(_unfold(t, mode), full_matrices=False)
    return u[:, :rank]


def partial_tucker_modes01(w, ranks, n_iter=30):
    """tensorly-style partial_tucker(modes=[0,1], init='svd') via HOOI.
    (reference uses n_iter_max=2_000_000 with a tolerance; 30 iters converges
    for these small kernels.)"""
    last = _leading_svd(w, 0, ranks[0])
    first = _leading_svd(w, 1, ranks[1])
    for _ in range(n_iter):
        y = _mode_dot(w, first.T, 1)
        last = _leading_svd(y, 0, ranks[0])
        y = _mode_dot(w, last.T, 0)
        first = _leading_svd(y, 1, ranks[1])
    core = _mode_dot(_mode_dot(w, last.T, 0), first.T, 1)
    return core, (last, first)


def effective_group_weight(weight, groups):
    """Weight actually applied to every group chunk in the reference forward."""
    cout_g = weight.shape[0] // groups
    # Bug-faithful: conv_list holds one shared module -> last group's slice wins.
    w_last = weight[cout_g * (groups - 1): cout_g * groups]
    cout, cin = w_last.shape[0], w_last.shape[1]
    if cin == 1 or cout == 1:
        # tucker_decomposition_conv_layer returns the layer unchanged.
        return w_last
    ranks = [max(int(0.5 * cout), 2), max(int(0.5 * cin), 2)]
    core, (last, first) = partial_tucker_modes01(w_last, ranks)
    # 1x1(first^T) -> kxk(core) -> 1x1(last) composes to this single kxk weight.
    return _mode_dot(_mode_dot(core, last, 0), first, 1)
    # TODO(synk): get_mse / total_mse_score / mse_config global bookkeeping and
    # print(*new_layers) are host-side side effects with no kernel equivalent.


# -----------------------------------------------------------------------------
# Pallas kernel: fused im2col + matmul, one (or a few) image(s) per grid step
# -----------------------------------------------------------------------------
def _make_fused_conv_kernel(*, nb_tile, kh, kw, sh, sw, wp, ho, wo):
    # Contiguous flat window: output position (y, x) sits at offset y*sh*wp+x*sw.
    lv = (ho - 1) * sh * wp + (wo - 1) * sw + 1

    def kernel(w_ref, x_ref, o_ref):
        # w_ref: (KH*KW, COUT, CIN)     compute dtype, constant block (DMA'd once)
        # x_ref: (NB_TILE, CIN, HP*WP)  compute dtype (padded image, spatial flat)
        # o_ref: (NB_TILE, COUT, HO*WO) out dtype (final layout, lane-dense)
        w_all = w_ref[...]                                   # tiny, stays resident
        for b in range(nb_tile):                             # static unroll
            xf = x_ref[b]                                    # (CIN, HP*WP)
            acc = None
            for i in range(kh):
                for j in range(kw):
                    # im2col tap built purely in VMEM/vregs (never HBM); the
                    # contiguous window includes row-crossing "wrap" columns
                    # that are compacted away below.
                    tap = xf[:, i * wp + j: i * wp + j + lv]          # (CIN, LV)
                    part = jnp.dot(w_all[i * kw + j], tap,
                                   preferred_element_type=jnp.float32)  # f32 acc
                    acc = part if acc is None else acc + part
            # Keep only the valid columns y*sh*wp + x*sw, x in [0, WO).
            rows = [acc[:, y * sh * wp: y * sh * wp + (wo - 1) * sw + 1: sw]
                    for y in range(ho)]
            o_ref[b] = jnp.concatenate(rows, axis=1).astype(o_ref.dtype)

    return kernel


# -----------------------------------------------------------------------------
# "Module" init + jitted forward
# -----------------------------------------------------------------------------
def make_group_decomposition_conv(weight, *, groups, stride=(1, 1), padding=(0, 0),
                                  compute_dtype=jnp.bfloat16,
                                  out_dtype=jnp.bfloat16,
                                  min_grid_steps=4,
                                  target_step_bytes=2 << 20):
    """Builds the decomposed effective weight ONCE (like the PyTorch __init__)
    and returns (jitted forward(x), effective_weight)."""
    cout_total, cin_g, kh, kw = weight.shape
    assert cout_total % groups == 0, "out_channels must be divisible by groups"
    cout_g = cout_total // groups
    sh, sw = stride
    ph, pw = padding

    w_eff = effective_group_weight(weight, groups)           # (cout_g, cin_g, kh, kw)
    # Kernel layout: tap-major, w3d[i*kw + j, o, c] = w_eff[o, c, i, j].
    w3d = jnp.transpose(w_eff, (2, 3, 0, 1)).reshape(kh * kw, cout_g, cin_g)
    w3d = w3d.astype(compute_dtype)

    @jax.jit
    def forward(x):
        n, c_in, h, w = x.shape
        assert c_in % groups == 0 and c_in // groups == cin_g, \
            "in_channels must equal groups * weight.shape[1]"
        hp, wp = h + 2 * ph, w + 2 * pw
        ho = (hp - kh) // sh + 1
        wo = (wp - kw) // sw + 1
        nb = n * groups

        # x.chunk(groups, dim=1) -> pseudo-batch axis: a free metadata reshape.
        # Pad + bf16 cast is the only extra XLA pass over the input; flattening
        # (HP, WP) -> HP*WP is free (contiguous).  No im2col in HBM.
        xg = x.reshape(nb, cin_g, h, w).astype(compute_dtype)
        x_flat = jnp.pad(xg, ((0, 0), (0, 0), (ph, ph), (pw, pw))
                         ).reshape(nb, cin_g, hp * wp)

        per_image = (_vmem_block_bytes(cin_g, hp * wp, compute_dtype)
                     + _vmem_block_bytes(cout_g, ho * wo, out_dtype))
        nb_tile = _pick_nb_tile(nb, per_image,
                                target_step_bytes=target_step_bytes,
                                min_steps=min_grid_steps)
        grid = (nb // nb_tile,)

        # VMEM guard: only request a limit if double-buffered blocks would crowd
        # v5e's 16 MiB default scoped VMEM; stay well under v7x's 64 MiB physical.
        w_bytes = (kh * kw) * _vmem_block_bytes(cout_g, cin_g, compute_dtype)
        dbl_buf = 2 * nb_tile * per_image + 2 * w_bytes
        cp_kwargs = dict(dimension_semantics=("parallel",))
        if dbl_buf > 12 * 1024 * 1024:
            cp_kwargs["vmem_limit_bytes"] = min(2 * dbl_buf, 60 * 1024 * 1024)

        kernel = _make_fused_conv_kernel(nb_tile=nb_tile, kh=kh, kw=kw,
                                         sh=sh, sw=sw, wp=wp, ho=ho, wo=wo)

        out = pl.pallas_call(
            kernel,
            out_shape=jax.ShapeDtypeStruct((nb, cout_g, ho * wo), out_dtype),
            grid_spec=pltpu.PrefetchScalarGridSpec(
                num_scalar_prefetch=0,
                grid=grid,
                in_specs=[
                    # constant index_map -> weight DMA'd once, never re-fetched
                    pl.BlockSpec((kh * kw, cout_g, cin_g), lambda b: (0, 0, 0)),
                    pl.BlockSpec((nb_tile, cin_g, hp * wp), lambda b: (b, 0, 0)),
                ],
                out_specs=pl.BlockSpec((nb_tile, cout_g, ho * wo),
                                       lambda b: (b, 0, 0)),
            ),
            compiler_params=pltpu.CompilerParams(**cp_kwargs),
        )(w3d, x_flat)

        # pseudo-batch is (sample-major, group-minor), so torch.cat over groups
        # along channels is exactly this free reshape (no transpose pass).
        return out.reshape(n, groups * cout_g, ho, wo)

    return forward, w_eff


# Pure-JAX reference (same effective weight, lax conv) for a sanity check.
def reference_forward(x, w_eff, *, groups, stride, padding):
    xs = jnp.split(x, groups, axis=1)
    outs = [lax.conv_general_dilated(
                xg, w_eff, window_strides=stride,
                padding=[(padding[0], padding[0]), (padding[1], padding[1])],
                dimension_numbers=("NCHW", "OIHW", "NCHW"),
                precision=lax.Precision.HIGHEST)
            for xg in xs]
    return jnp.concatenate(outs, axis=1)


if __name__ == "__main__":
    key = jax.random.PRNGKey(0)
    kx, kw_ = jax.random.split(key)

    # docstring example: conv(24, 36, kernel_size=3, groups=4), small spatial dims
    N, C_IN, H, W = 2, 24, 16, 16
    C_OUT, GROUPS, K = 36, 4, 3
    STRIDE, PADDING = (1, 1), (1, 1)

    x = jax.random.normal(kx, (N, C_IN, H, W), dtype=jnp.float32)
    weight = 0.1 * jax.random.normal(
        kw_, (C_OUT, C_IN // GROUPS, K, K), dtype=jnp.float32)

    # "module init" (Tucker/HOOI hoisted out of the forward path) + jitted forward
    forward, w_eff = make_group_decomposition_conv(
        weight, groups=GROUPS, stride=STRIDE, padding=PADDING)

    out = jax.block_until_ready(forward(x))

    ref = reference_forward(x, w_eff, groups=GROUPS, stride=STRIDE, padding=PADDING)
    assert out.shape == (N, C_OUT, H, W), out.shape
    out_f32 = out.astype(jnp.float32)
    max_err = float(jnp.max(jnp.abs(out_f32 - ref)))
    # bf16-in / f32-accumulate / bf16-out vs f32 HIGHEST reference: error is well
    # below the Tucker approximation's own ~1e-2 in any real use of this module.
    assert jnp.allclose(out_f32, ref, rtol=3e-2, atol=3e-2), max_err
    print("KERNEL_OK")
</pallas_src>

<mosaic_0001>
module attributes {stable_mosaic.version = 11 : i64} {
  func.func @kernel(%arg0: i32, %arg1: memref<9x9x6xbf16, #tpu.memory_space<vmem>>, %arg2: memref<2x6x324xbf16, #tpu.memory_space<vmem>>, %arg3: memref<2x9x256xbf16, #tpu.memory_space<vmem>>) attributes {dimension_semantics = [#tpu.dimension_semantics<parallel>], iteration_bounds = array<i64: 4>, scalar_prefetch = 0 : i64, scratch_operands = 0 : i64, tpu.core_type = #tpu.core_type<tc>, window_params = [{pipeline_mode = #tpu.pipeline_mode<synchronous>, transform_indices = @transform_0, window_bounds = array<i64: 9, 9, 6>}, {transform_indices = @transform_1, window_bounds = array<i64: 2, 6, 324>}, {transform_indices = @transform_2, window_bounds = array<i64: 2, 9, 256>}]} {
    %c0 = arith.constant 0 : index
    %c0_0 = arith.constant 0 : index
    %c0_1 = arith.constant 0 : index
    %0 = vector.load %arg1[%c0, %c0_0, %c0_1] : memref<9x9x6xbf16, #tpu.memory_space<vmem>>, vector<9x9x6xbf16>
    %c0_2 = arith.constant 0 : index
    %c0_3 = arith.constant 0 : index
    %c0_4 = arith.constant 0 : index
    %1 = vector.load %arg2[%c0_2, %c0_3, %c0_4] : memref<2x6x324xbf16, #tpu.memory_space<vmem>>, vector<1x6x324xbf16>
    %2 = vector.shape_cast %1 : vector<1x6x324xbf16> to vector<6x324xbf16>
    %3 = vector.extract_strided_slice %2 {offsets = [0, 0], sizes = [6, 286], strides = [1, 1]} : vector<6x324xbf16> to vector<6x286xbf16>
    %4 = vector.extract_strided_slice %0 {offsets = [0, 0, 0], sizes = [1, 9, 6], strides = [1, 1, 1]} : vector<9x9x6xbf16> to vector<1x9x6xbf16>
    %5 = vector.shape_cast %4 : vector<1x9x6xbf16> to vector<9x6xbf16>
    %cst = arith.constant dense<0.000000e+00> : vector<9x286xf32>
    %6 = tpu.matmul %5, %3, %cst {dimension_numbers = #tpu.dot_dimension_numbers<[1], [0], [0], [1], [0, 0, 1, 1], [], []>} : vector<9x6xbf16>, vector<6x286xbf16>, vector<9x286xf32> -> vector<9x286xf32>
    %7 = vector.extract_strided_slice %2 {offsets = [0, 1], sizes = [6, 286], strides = [1, 1]} : vector<6x324xbf16> to vector<6x286xbf16>
    %8 = vector.extract_strided_slice %0 {offsets = [1, 0, 0], sizes = [1, 9, 6], strides = [1, 1, 1]} : vector<9x9x6xbf16> to vector<1x9x6xbf16>
    %9 = vector.shape_cast %8 : vector<1x9x6xbf16> to vector<9x6xbf16>
    %cst_5 = arith.constant dense<0.000000e+00> : vector<9x286xf32>
    %10 = tpu.matmul %9, %7, %cst_5 {dimension_numbers = #tpu.dot_dimension_numbers<[1], [0], [0], [1], [0, 0, 1, 1], [], []>} : vector<9x6xbf16>, vector<6x286xbf16>, vector<9x286xf32> -> vector<9x286xf32>
    %11 = arith.addf %6, %10 : vector<9x286xf32>
    %12 = vector.extract_strided_slice %2 {offsets = [0, 2], sizes = [6, 286], strides = [1, 1]} : vector<6x324xbf16> to vector<6x286xbf16>
    %13 = vector.extract_strided_slice %0 {offsets = [2, 0, 0], sizes = [1, 9, 6], strides = [1, 1, 1]} : vector<9x9x6xbf16> to vector<1x9x6xbf16>
    %14 = vector.shape_cast %13 : vector<1x9x6xbf16> to vector<9x6xbf16>
    %cst_6 = arith.constant dense<0.000000e+00> : vector<9x286xf32>
    %15 = tpu.matmul %14, %12, %cst_6 {dimension_numbers = #tpu.dot_dimension_numbers<[1], [0], [0], [1], [0, 0, 1, 1], [], []>} : vector<9x6xbf16>, vector<6x286xbf16>, vector<9x286xf32> -> vector<9x286xf32>
    %16 = arith.addf %11, %15 : vector<9x286xf32>
    %17 = vector.extract_strided_slice %2 {offsets = [0, 18], sizes = [6, 286], strides = [1, 1]} : vector<6x324xbf16> to vector<6x286xbf16>
    %18 = vector.extract_strided_slice %0 {offsets = [3, 0, 0], sizes = [1, 9, 6], strides = [1, 1, 1]} : vector<9x9x6xbf16> to vector<1x9x6xbf16>
    %19 = vector.shape_cast %18 : vector<1x9x6xbf16> to vector<9x6xbf16>
    %cst_7 = arith.constant dense<0.000000e+00> : vector<9x286xf32>
    %20 = tpu.matmul %19, %17, %cst_7 {dimension_numbers = #tpu.dot_dimension_numbers<[1], [0], [0], [1], [0, 0, 1, 1], [], []>} : vector<9x6xbf16>, vector<6x286xbf16>, vector<9x286xf32> -> vector<9x286xf32>
    %21 = arith.addf %16, %20 : vector<9x286xf32>
    %22 = vector.extract_strided_slice %2 {offsets = [0, 19], sizes = [6, 286], strides = [1, 1]} : vector<6x324xbf16> to vector<6x286xbf16>
    %23 = vector.extract_strided_slice %0 {offsets = [4, 0, 0], sizes = [1, 9, 6], strides = [1, 1, 1]} : vector<9x9x6xbf16> to vector<1x9x6xbf16>
    %24 = vector.shape_cast %23 : vector<1x9x6xbf16> to vector<9x6xbf16>
    %cst_8 = arith.constant dense<0.000000e+00> : vector<9x286xf32>
    %25 = tpu.matmul %24, %22, %cst_8 {dimension_numbers = #tpu.dot_dimension_numbers<[1], [0], [0], [1], [0, 0, 1, 1], [], []>} : vector<9x6xbf16>, vector<6x286xbf16>, vector<9x286xf32> -> vector<9x286xf32>
    %26 = arith.addf %21, %25 : vector<9x286xf32>
    %27 = vector.extract_strided_slice %2 {offsets = [0, 20], sizes = [6, 286], strides = [1, 1]} : vector<6x324xbf16> to vector<6x286xbf16>
    %28 = vector.extract_strided_slice %0 {offsets = [5, 0, 0], sizes = [1, 9, 6], strides = [1, 1, 1]} : vector<9x9x6xbf16> to vector<1x9x6xbf16>
    %29 = vector.shape_cast %28 : vector<1x9x6xbf16> to vector<9x6xbf16>
    %cst_9 = arith.constant dense<0.000000e+00> : vector<9x286xf32>
    %30 = tpu.matmul %29, %27, %cst_9 {dimension_numbers = #tpu.dot_dimension_numbers<[1], [0], [0], [1], [0, 0, 1, 1], [], []>} : vector<9x6xbf16>, vector<6x286xbf16>, vector<9x286xf32> -> vector<9x286xf32>
    %31 = arith.addf %26, %30 : vector<9x286xf32>
    %32 = vector.extract_strided_slice %2 {offsets = [0, 36], sizes = [6, 286], strides = [1, 1]} : vector<6x324xbf16> to vector<6x286xbf16>
    %33 = vector.extract_strided_slice %0 {offsets = [6, 0, 0], sizes = [1, 9, 6], strides = [1, 1, 1]} : vector<9x9x6xbf16> to vector<1x9x6xbf16>
    %34 = vector.shape_cast %33 : vector<1x9x6xbf16> to vector<9x6xbf16>
    %cst_10 = arith.constant dense<0.000000e+00> : vector<9x286xf32>
    %35 = tpu.matmul %34, %32, %cst_10 {dimension_numbers = #tpu.dot_dimension_numbers<[1], [0], [0], [1], [0, 0, 1, 1], [], []>} : vector<9x6xbf16>, vector<6x286xbf16>, vector<9x286xf32> -> vector<9x286xf32>
    %36 = arith.addf %31, %35 : vector<9x286xf32>
    %37 = vector.extract_strided_slice %2 {offsets = [0, 37], sizes = [6, 286], strides = [1, 1]} : vector<6x324xbf16> to vector<6x286xbf16>
    %38 = vector.extract_strided_slice %0 {offsets = [7, 0, 0], sizes = [1, 9, 6], strides = [1, 1, 1]} : vector<9x9x6xbf16> to vector<1x9x6xbf16>
    %39 = vector.shape_cast %38 : vector<1x9x6xbf16> to vector<9x6xbf16>
    %cst_11 = arith.constant dense<0.000000e+00> : vector<9x286xf32>
    %40 = tpu.matmul %39, %37, %cst_11 {dimension_numbers = #tpu.dot_dimension_numbers<[1], [0], [0], [1], [0, 0, 1, 1], [], []>} : vector<9x6xbf16>, vector<6x286xbf16>, vector<9x286xf32> -> vector<9x286xf32>
    %41 = arith.addf %36, %40 : vector<9x286xf32>
    %42 = vector.extract_strided_slice %2 {offsets = [0, 38], sizes = [6, 286], strides = [1, 1]} : vector<6x324xbf16> to vector<6x286xbf16>
    %43 = vector.extract_strided_slice %0 {offsets = [8, 0, 0], sizes = [1, 9, 6], strides = [1, 1, 1]} : vector<9x9x6xbf16> to vector<1x9x6xbf16>
    %44 = vector.shape_cast %43 : vector<1x9x6xbf16> to vector<9x6xbf16>
    %cst_12 = arith.constant dense<0.000000e+00> : vector<9x286xf32>
    %45 = tpu.matmul %44, %42, %cst_12 {dimension_numbers = #tpu.dot_dimension_numbers<[1], [0], [0], [1], [0, 0, 1, 1], [], []>} : vector<9x6xbf16>, vector<6x286xbf16>, vector<9x286xf32> -> vector<9x286xf32>
    %46 = arith.addf %41, %45 : vector<9x286xf32>
    %47 = vector.extract_strided_slice %46 {offsets = [0, 0], sizes = [9, 16], strides = [1, 1]} : vector<9x286xf32> to vector<9x16xf32>
    %48 = vector.extract_strided_slice %46 {offsets = [0, 18], sizes = [9, 16], strides = [1, 1]} : vector<9x286xf32> to vector<9x16xf32>
    %49 = vector.extract_strided_slice %46 {offsets = [0, 36], sizes = [9, 16], strides = [1, 1]} : vector<9x286xf32> to vector<9x16xf32>
    %50 = vector.extract_strided_slice %46 {offsets = [0, 54], sizes = [9, 16], strides = [1, 1]} : vector<9x286xf32> to vector<9x16xf32>
    %51 = vector.extract_strided_slice %46 {offsets = [0, 72], sizes = [9, 16], strides = [1, 1]} : vector<9x286xf32> to vector<9x16xf32>
    %52 = vector.extract_strided_slice %46 {offsets = [0, 90], sizes = [9, 16], strides = [1, 1]} : vector<9x286xf32> to vector<9x16xf32>
    %53 = vector.extract_strided_slice %46 {offsets = [0, 108], sizes = [9, 16], strides = [1, 1]} : vector<9x286xf32> to vector<9x16xf32>
    %54 = vector.extract_strided_slice %46 {offsets = [0, 126], sizes = [9, 16], strides = [1, 1]} : vector<9x286xf32> to vector<9x16xf32>
    %55 = vector.extract_strided_slice %46 {offsets = [0, 144], sizes = [9, 16], strides = [1, 1]} : vector<9x286xf32> to vector<9x16xf32>
    %56 = vector.extract_strided_slice %46 {offsets = [0, 162], sizes = [9, 16], strides = [1, 1]} : vector<9x286xf32> to vector<9x16xf32>
    %57 = vector.extract_strided_slice %46 {offsets = [0, 180], sizes = [9, 16], strides = [1, 1]} : vector<9x286xf32> to vector<9x16xf32>
    %58 = vector.extract_strided_slice %46 {offsets = [0, 198], sizes = [9, 16], strides = [1, 1]} : vector<9x286xf32> to vector<9x16xf32>
    %59 = vector.extract_strided_slice %46 {offsets = [0, 216], sizes = [9, 16], strides = [1, 1]} : vector<9x286xf32> to vector<9x16xf32>
    %60 = vector.extract_strided_slice %46 {offsets = [0, 234], sizes = [9, 16], strides = [1, 1]} : vector<9x286xf32> to vector<9x16xf32>
    %61 = vector.extract_strided_slice %46 {offsets = [0, 252], sizes = [9, 16], strides = [1, 1]} : vector<9x286xf32> to vector<9x16xf32>
    %62 = vector.extract_strided_slice %46 {offsets = [0, 270], sizes = [9, 16], strides = [1, 1]} : vector<9x286xf32> to vector<9x16xf32>
    %63 = tpu.concatenate %47, %48, %49, %50, %51, %52, %53, %54, %55, %56, %57, %58, %59, %60, %61, %62 in 1 : vector<9x16xf32>, vector<9x16xf32>, vector<9x16xf32>, vector<9x16xf32>, vector<9x16xf32>, vector<9x16xf32>, vector<9x16xf32>, vector<9x16xf32>, vector<9x16xf32>, vector<9x16xf32>, vector<9x16xf32>, vector<9x16xf32>, vector<9x16xf32>, vector<9x16xf32>, vector<9x16xf32>, vector<9x16xf32> -> vector<9x256xf32>
    %64 = arith.truncf %63 : vector<9x256xf32> to vector<9x256xbf16>
    %c0_13 = arith.constant 0 : index
    %c0_14 = arith.constant 0 : index
    %c0_15 = arith.constant 0 : index
    %65 = vector.load %arg3[%c0_13, %c0_14, %c0_15] : memref<2x9x256xbf16, #tpu.memory_space<vmem>>, vector<1x9x256xbf16>
    %66 = vector.shape_cast %65 : vector<1x9x256xbf16> to vector<9x256xbf16>
    %67 = vector.shape_cast %64 : vector<9x256xbf16> to vector<1x9x256xbf16>
    tpu.vector_store %arg3[%c0_13, %c0_14, %c0_15], %67 {strides = array<i32>} : memref<2x9x256xbf16, #tpu.memory_space<vmem>>, vector<1x9x256xbf16>,
    %c1 = arith.constant 1 : index
    %c0_16 = arith.constant 0 : index
    %c0_17 = arith.constant 0 : index
    %68 = vector.load %arg2[%c1, %c0_16, %c0_17] : memref<2x6x324xbf16, #tpu.memory_space<vmem>>, vector<1x6x324xbf16>
    %69 = vector.shape_cast %68 : vector<1x6x324xbf16> to vector<6x324xbf16>
    %70 = vector.extract_strided_slice %69 {offsets = [0, 0], sizes = [6, 286], strides = [1, 1]} : vector<6x324xbf16> to vector<6x286xbf16>
    %71 = vector.extract_strided_slice %0 {offsets = [0, 0, 0], sizes = [1, 9, 6], strides = [1, 1, 1]} : vector<9x9x6xbf16> to vector<1x9x6xbf16>
    %72 = vector.shape_cast %71 : vector<1x9x6xbf16> to vector<9x6xbf16>
    %cst_18 = arith.constant dense<0.000000e+00> : vector<9x286xf32>
    %73 = tpu.matmul %72, %70, %cst_18 {dimension_numbers = #tpu.dot_dimension_numbers<[1], [0], [0], [1], [0, 0, 1, 1], [], []>} : vector<9x6xbf16>, vector<6x286xbf16>, vector<9x286xf32> -> vector<9x286xf32>
    %74 = vector.extract_strided_slice %69 {offsets = [0, 1], sizes = [6, 286], strides = [1, 1]} : vector<6x324xbf16> to vector<6x286xbf16>
    %75 = vector.extract_strided_slice %0 {offsets = [1, 0, 0], sizes = [1, 9, 6], strides = [1, 1, 1]} : vector<9x9x6xbf16> to vector<1x9x6xbf16>
    %76 = vector.shape_cast %75 : vector<1x9x6xbf16> to vector<9x6xbf16>
    %cst_19 = arith.constant dense<0.000000e+00> : vector<9x286xf32>
    %77 = tpu.matmul %76, %74, %cst_19 {dimension_numbers = #tpu.dot_dimension_numbers<[1], [0], [0], [1], [0, 0, 1, 1], [], []>} : vector<9x6xbf16>, vector<6x286xbf16>, vector<9x286xf32> -> vector<9x286xf32>
    %78 = arith.addf %73, %77 : vector<9x286xf32>
    %79 = vector.extract_strided_slice %69 {offsets = [0, 2], sizes = [6, 286], strides = [1, 1]} : vector<6x324xbf16> to vector<6x286xbf16>
    %80 = vector.extract_strided_slice %0 {offsets = [2, 0, 0], sizes = [1, 9, 6], strides = [1, 1, 1]} : vector<9x9x6xbf16> to vector<1x9x6xbf16>
    %81 = vector.shape_cast %80 : vector<1x9x6xbf16> to vector<9x6xbf16>
    %cst_20 = arith.constant dense<0.000000e+00> : vector<9x286xf32>
    %82 = tpu.matmul %81, %79, %cst_20 {dimension_numbers = #tpu.dot_dimension_numbers<[1], [0], [0], [1], [0, 0, 1, 1], [], []>} : vector<9x6xbf16>, vector<6x286xbf16>, vector<9x286xf32> -> vector<9x286xf32>
    %83 = arith.addf %78, %82 : vector<9x286xf32>
    %84 = vector.extract_strided_slice %69 {offsets = [0, 18], sizes = [6, 286], strides = [1, 1]} : vector<6x324xbf16> to vector<6x286xbf16>
    %85 = vector.extract_strided_slice %0 {offsets = [3, 0, 0], sizes = [1, 9, 6], strides = [1, 1, 1]} : vector<9x9x6xbf16> to vector<1x9x6xbf16>
    %86 = vector.shape_cast %85 : vector<1x9x6xbf16> to vector<9x6xbf16>
    %cst_21 = arith.constant dense<0.000000e+00> : vector<9x286xf32>
    %87 = tpu.matmul %86, %84, %cst_21 {dimension_numbers = #tpu.dot_dimension_numbers<[1], [0], [0], [1], [0, 0, 1, 1], [], []>} : vector<9x6xbf16>, vector<6x286xbf16>, vector<9x286xf32> -> vector<9x286xf32>
    %88 = arith.addf %83, %87 : vector<9x286xf32>
    %89 = vector.extract_strided_slice %69 {offsets = [0, 19], sizes = [6, 286], strides = [1, 1]} : vector<6x324xbf16> to vector<6x286xbf16>
    %90 = vector.extract_strided_slice %0 {offsets = [4, 0, 0], sizes = [1, 9, 6], strides = [1, 1, 1]} : vector<9x9x6xbf16> to vector<1x9x6xbf16>
    %91 = vector.shape_cast %90 : vector<1x9x6xbf16> to vector<9x6xbf16>
    %cst_22 = arith.constant dense<0.000000e+00> : vector<9x286xf32>
    %92 = tpu.matmul %91, %89, %cst_22 {dimension_numbers = #tpu.dot_dimension_numbers<[1], [0], [0], [1], [0, 0, 1, 1], [], []>} : vector<9x6xbf16>, vector<6x286xbf16>, vector<9x286xf32> -> vector<9x286xf32>
    %93 = arith.addf %88, %92 : vector<9x286xf32>
    %94 = vector.extract_strided_slice %69 {offsets = [0, 20], sizes = [6, 286], strides = [1, 1]} : vector<6x324xbf16> to vector<6x286xbf16>
    %95 = vector.extract_strided_slice %0 {offsets = [5, 0, 0], sizes = [1, 9, 6], strides = [1, 1, 1]} : vector<9x9x6xbf16> to vector<1x9x6xbf16>
    %96 = vector.shape_cast %95 : vector<1x9x6xbf16> to vector<9x6xbf16>
    %cst_23 = arith.constant dense<0.000000e+00> : vector<9x286xf32>
    %97 = tpu.matmul %96, %94, %cst_23 {dimension_numbers = #tpu.dot_dimension_numbers<[1], [0], [0], [1], [0, 0, 1, 1], [], []>} : vector<9x6xbf16>, vector<6x286xbf16>, vector<9x286xf32> -> vector<9x286xf32>
    %98 = arith.addf %93, %97 : vector<9x286xf32>
    %99 = vector.extract_strided_slice %69 {offsets = [0, 36], sizes = [6, 286], strides = [1, 1]} : vector<6x324xbf16> to vector<6x286xbf16>
    %100 = vector.extract_strided_slice %0 {offsets = [6, 0, 0], sizes = [1, 9, 6], strides = [1, 1, 1]} : vector<9x9x6xbf16> to vector<1x9x6xbf16>
    %101 = vector.shape_cast %100 : vector<1x9x6xbf16> to vector<9x6xbf16>
    %cst_24 = arith.constant dense<0.000000e+00> : vector<9x286xf32>
    %102 = tpu.matmul %101, %99, %cst_24 {dimension_numbers = #tpu.dot_dimension_numbers<[1], [0], [0], [1], [0, 0, 1, 1], [], []>} : vector<9x6xbf16>, vector<6x286xbf16>, vector<9x286xf32> -> vector<9x286xf32>
    %103 = arith.addf %98, %102 : vector<9x286xf32>
    %104 = vector.extract_strided_slice %69 {offsets = [0, 37], sizes = [6, 286], strides = [1, 1]} : vector<6x324xbf16> to vector<6x286xbf16>
    %105 = vector.extract_strided_slice %0 {offsets = [7, 0, 0], sizes = [1, 9, 6], strides = [1, 1, 1]} : vector<9x9x6xbf16> to vector<1x9x6xbf16>
    %106 = vector.shape_cast %105 : vector<1x9x6xbf16> to vector<9x6xbf16>
    %cst_25 = arith.constant dense<0.000000e+00> : vector<9x286xf32>
    %107 = tpu.matmul %106, %104, %cst_25 {dimension_numbers = #tpu.dot_dimension_numbers<[1], [0], [0], [1], [0, 0, 1, 1], [], []>} : vector<9x6xbf16>, vector<6x286xbf16>, vector<9x286xf32> -> vector<9x286xf32>
    %108 = arith.addf %103, %107 : vector<9x286xf32>
    %109 = vector.extract_strided_slice %69 {offsets = [0, 38], sizes = [6, 286], strides = [1, 1]} : vector<6x324xbf16> to vector<6x286xbf16>
    %110 = vector.extract_strided_slice %0 {offsets = [8, 0, 0], sizes = [1, 9, 6], strides = [1, 1, 1]} : vector<9x9x6xbf16> to vector<1x9x6xbf16>
    %111 = vector.shape_cast %110 : vector<1x9x6xbf16> to vector<9x6xbf16>
    %cst_26 = arith.constant dense<0.000000e+00> : vector<9x286xf32>
    %112 = tpu.matmul %111, %109, %cst_26 {dimension_numbers = #tpu.dot_dimension_numbers<[1], [0], [0], [1], [0, 0, 1, 1], [], []>} : vector<9x6xbf16>, vector<6x286xbf16>, vector<9x286xf32> -> vector<9x286xf32>
    %113 = arith.addf %108, %112 : vector<9x286xf32>
    %114 = vector.extract_strided_slice %113 {offsets = [0, 0], sizes = [9, 16], strides = [1, 1]} : vector<9x286xf32> to vector<9x16xf32>
    %115 = vector.extract_strided_slice %113 {offsets = [0, 18], sizes = [9, 16], strides = [1, 1]} : vector<9x286xf32> to vector<9x16xf32>
    %116 = vector.extract_strided_slice %113 {offsets = [0, 36], sizes = [9, 16], strides = [1, 1]} : vector<9x286xf32> to vector<9x16xf32>
    %117 = vector.extract_strided_slice %113 {offsets = [0, 54], sizes = [9, 16], strides = [1, 1]} : vector<9x286xf32> to vector<9x16xf32>
    %118 = vector.extract_strided_slice %113 {offsets = [0, 72], sizes = [9, 16], strides = [1, 1]} : vector<9x286xf32> to vector<9x16xf32>
    %119 = vector.extract_strided_slice %113 {offsets = [0, 90], sizes = [9, 16], strides = [1, 1]} : vector<9x286xf32> to vector<9x16xf32>
    %120 = vector.extract_strided_slice %113 {offsets = [0, 108], sizes = [9, 16], strides = [1, 1]} : vector<9x286xf32> to vector<9x16xf32>
    %121 = vector.extract_strided_slice %113 {offsets = [0, 126], sizes = [9, 16], strides = [1, 1]} : vector<9x286xf32> to vector<9x16xf32>
    %122 = vector.extract_strided_slice %113 {offsets = [0, 144], sizes = [9, 16], strides = [1, 1]} : vector<9x286xf32> to vector<9x16xf32>
    %123 = vector.extract_strided_slice %113 {offsets = [0, 162], sizes = [9, 16], strides = [1, 1]} : vector<9x286xf32> to vector<9x16xf32>
    %124 = vector.extract_strided_slice %113 {offsets = [0, 180], sizes = [9, 16], strides = [1, 1]} : vector<9x286xf32> to vector<9x16xf32>
    %125 = vector.extract_strided_slice %113 {offsets = [0, 198], sizes = [9, 16], strides = [1, 1]} : vector<9x286xf32> to vector<9x16xf32>
    %126 = vector.extract_strided_slice %113 {offsets = [0, 216], sizes = [9, 16], strides = [1, 1]} : vector<9x286xf32> to vector<9x16xf32>
    %127 = vector.extract_strided_slice %113 {offsets = [0, 234], sizes = [9, 16], strides = [1, 1]} : vector<9x286xf32> to vector<9x16xf32>
    %128 = vector.extract_strided_slice %113 {offsets = [0, 252], sizes = [9, 16], strides = [1, 1]} : vector<9x286xf32> to vector<9x16xf32>
    %129 = vector.extract_strided_slice %113 {offsets = [0, 270], sizes = [9, 16], strides = [1, 1]} : vector<9x286xf32> to vector<9x16xf32>
    %130 = tpu.concatenate %114, %115, %116, %117, %118, %119, %120, %121, %122, %123, %124, %125, %126, %127, %128, %129 in 1 : vector<9x16xf32>, vector<9x16xf32>, vector<9x16xf32>, vector<9x16xf32>, vector<9x16xf32>, vector<9x16xf32>, vector<9x16xf32>, vector<9x16xf32>, vector<9x16xf32>, vector<9x16xf32>, vector<9x16xf32>, vector<9x16xf32>, vector<9x16xf32>, vector<9x16xf32>, vector<9x16xf32>, vector<9x16xf32> -> vector<9x256xf32>
    %131 = arith.truncf %130 : vector<9x256xf32> to vector<9x256xbf16>
    %c1_27 = arith.constant 1 : index
    %c0_28 = arith.constant 0 : index
    %c0_29 = arith.constant 0 : index
    %132 = vector.load %arg3[%c1_27, %c0_28, %c0_29] : memref<2x9x256xbf16, #tpu.memory_space<vmem>>, vector<1x9x256xbf16>
    %133 = vector.shape_cast %132 : vector<1x9x256xbf16> to vector<9x256xbf16>
    %134 = vector.shape_cast %131 : vector<9x256xbf16> to vector<1x9x256xbf16>
    tpu.vector_store %arg3[%c1_27, %c0_28, %c0_29], %134 {strides = array<i32>} : memref<2x9x256xbf16, #tpu.memory_space<vmem>>, vector<1x9x256xbf16>,
    return
  }
  func.func @transform_0(%arg0: i32) -> (i32, i32, i32) {
    %c0_i32 = arith.constant 0 : i32
    %c0_i32_0 = arith.constant 0 : i32
    %c0_i32_1 = arith.constant 0 : i32
    %c0_i32_2 = arith.constant 0 : i32
    return %c0_i32, %c0_i32_0, %c0_i32_1 : i32, i32, i32
  }
  func.func @transform_1(%arg0: i32) -> (i32, i32, i32) {
    %c0_i32 = arith.constant 0 : i32
    %c0_i32_0 = arith.constant 0 : i32
    %c0_i32_1 = arith.constant 0 : i32
    return %arg0, %c0_i32, %c0_i32_0 : i32, i32, i32
  }
  func.func @transform_2(%arg0: i32) -> (i32, i32, i32) {
    %c0_i32 = arith.constant 0 : i32
    %c0_i32_0 = arith.constant 0 : i32
    %c0_i32_1 = arith.constant 0 : i32
    return %arg0, %c0_i32, %c0_i32_0 : i32, i32, i32
  }
}

</mosaic_0001>

<llo_original>
// kernel: forward.1
$region0: #{forward.1}
  #allocation0 [shape = 'u32[]', space=smem, size = 0x4, offset = 0x4, fixed_abs, tag = 'smem constant byte address 0x4 - core index']
  #allocation1 [shape = 'u32[72,128]{1,0:T(1,128)}', space=vmem, size = 0x9000, scoped, tag = 'internal scratch']
  %s0 = inlined_call_operand.vmem [shape: bf16[9,9,6], index: 0, kind: input, shape index: {}]
  %s1 = inlined_call_operand.vmem [shape: bf16[8,6,324], index: 1, kind: input, shape index: {}]
  %s2 = inlined_call_operand.vmem [shape: bf16[8,9,256], index: 2, kind: output, shape index: {}]
  %s3 = sld [smem:[#allocation0]]
  $region41: #{forward.1} parent=0
    _
  %s5 = ssub.s32 1, %s3
  %s6 = scalar_select 0, %s5, %s3
  loop: start=0, step=1, limit=6
  $region2: #{forward.1} parent=0 // loop_pre_header
    _
  $region3: #{forward.1} parent=0 // loop_header
    %s8 = sphi 0, %s12
    %p9 = scmp.ge.s32.totalorder %s8, 6
    %s16 = sphi 0, %s16
    %s18 = sphi 0, %s16
    %s19 = sphi 0, %s18
    %s33 = sphi 0, %s19
    %s39 = sphi 0, %s41
    %s42 = sphi 0, %s39
    %s43 = sphi 0, %s42
    %s59 = sphi 0, %s43
    %s65 = sphi 0, %s67
    %s68 = sphi 0, %s65
    %s69 = sphi 0, %s68
    %s85 = sphi 0, %s69
  $region4: #{forward.1} parent=0 // loop_header_branch
    %11 = sbr.rel (%p9) target = $region8
  $region5: #{forward.1} parent=0 // loop_body
    %s13 = ssub.s32 %s8, 1
    %s14 = ssub.s32 %s8, 2
    %s15 = sadd.s32 %s8, 1
    %s17 = sadd.s32 %s16, 1
    %p20 = scmp.eq.s32.totalorder %s8, 3
    %p21 = scmp.ne.s32.totalorder %s16, %s18
    %p22 = scmp.eq.s32.totalorder %s8, 0
    %p23 = por %p21, %p22
    %p24 = scmp.ne.s32.totalorder %s16, %s18
    %p25 = scmp.eq.s32.totalorder %s13, 3
    %p26 = por %p24, %p25
    %p27 = scmp.ne.s32.totalorder %s18, %s19
    %p28 = scmp.eq.s32.totalorder %s13, 0
    %p29 = por %p27, %p28
    %p30 = scmp.ne.s32.totalorder %s18, %s19
    %p31 = scmp.eq.s32.totalorder %s14, 3
    %p32 = por %p30, %p31
    %p34 = scmp.ne.s32.totalorder %s19, %s33
    %p35 = scmp.eq.s32.totalorder %s14, 0
    %p36 = por %p34, %p35
    %s37 = ssub.s32 %s8, %s15
    %p38 = scmp.eq.s32.totalorder %s37, 0
    %s40 = sadd.s32 %s39, 1
    %s41 = scalar_select %p38, %s39, %s40
    %p44 = pneg %p38
    %p45 = scmp.eq.s32.totalorder %s8, 3
    %p46 = por %p44, %p45
    %p47 = scmp.ne.s32.totalorder %s39, %s42
    %p48 = scmp.eq.s32.totalorder %s8, 0
    %p49 = por %p47, %p48
    %p50 = scmp.ne.s32.totalorder %s39, %s42
    %p51 = scmp.eq.s32.totalorder %s13, 3
    %p52 = por %p50, %p51
    %p53 = scmp.ne.s32.totalorder %s42, %s43
    %p54 = scmp.eq.s32.totalorder %s13, 0
    %p55 = por %p53, %p54
    %p56 = scmp.ne.s32.totalorder %s42, %s43
    %p57 = scmp.eq.s32.totalorder %s14, 3
    %p58 = por %p56, %p57
    %p60 = scmp.ne.s32.totalorder %s43, %s59
    %p61 = scmp.eq.s32.totalorder %s14, 0
    %p62 = por %p60, %p61
    %s63 = ssub.s32 %s8, %s15
    %p64 = scmp.eq.s32.totalorder %s63, 0
    %s66 = sadd.s32 %s65, 1
    %s67 = scalar_select %p64, %s65, %s66
    %p70 = pneg %p64
    %p71 = scmp.eq.s32.totalorder %s8, 3
    %p72 = por %p70, %p71
    %p73 = scmp.ne.s32.totalorder %s65, %s68
    %p74 = scmp.eq.s32.totalorder %s8, 0
    %p75 = por %p73, %p74
    %p76 = scmp.ne.s32.totalorder %s65, %s68
    %p77 = scmp.eq.s32.totalorder %s13, 3
    %p78 = por %p76, %p77
    %p79 = scmp.ne.s32.totalorder %s68, %s69
    %p80 = scmp.eq.s32.totalorder %s13, 0
    %p81 = por %p79, %p80
    %p82 = scmp.ne.s32.totalorder %s68, %s69
    %p83 = scmp.eq.s32.totalorder %s14, 3
    %p84 = por %p82, %p83
    %p86 = scmp.ne.s32.totalorder %s69, %s85
    %p87 = scmp.eq.s32.totalorder %s14, 0
    %p88 = por %p86, %p87
    %p89 = scmp.le.s32.totalorder 1, %s8
    %p90 = scmp.lt.s32.totalorder %s8, 5
    %p91 = pnand %p89, %p90
    %p92 = pneg %p91
    // Predicated region
    $region9: #{forward.1} parent=5 // pred_check
      _
    $region10: #{forward.1} parent=5 // pred_check_branch
      %94 = sbr.rel (%p91) target = $region12
    $region11: #{forward.1} parent=5 // pred_region
      %s95 = ssub.s32 %s8, 1
      // Predicated region
      $region13: #{forward.1} parent=11 // pred_check
        %p96 = pneg %p29
      $region14: #{forward.1} parent=11 // pred_check_branch
        %98 = sbr.rel (%p96) target = $region16
      $region15: #{forward.1} parent=11 // pred_region
        _
      $region16: #{forward.1} parent=11 // pred_fallthru
        _
    $region12: #{forward.1} parent=5 // pred_fallthru
      _
    %p99 = scmp.lt.s32.totalorder %s8, 4
    // Predicated region
    $region17: #{forward.1} parent=5 // pred_check
      %p100 = pneg %p99
    $region18: #{forward.1} parent=5 // pred_check_branch
      %102 = sbr.rel (%p100) target = $region20
    $region19: #{forward.1} parent=5 // pred_region
      // Predicated region
      $region21: #{forward.1} parent=19 // pred_check
        %p103 = pneg %p49
      $region22: #{forward.1} parent=19 // pred_check_branch
        %105 = sbr.rel (%p103) target = $region24
      $region23: #{forward.1} parent=19 // pred_region
        %s106 = smul.u32 2, %s8
        %p107 = scmp.lt.s32.totalorder %s106, 7
        %s108 = scalar_select %p107, %s106, 7
        %s109 = smul.addr %s108, 3
        %s110 = smul.addr %s109, 4
        %s111 = scalar_lea.vmem %s1, %s110
        %s112 = smul.u32 2, %s8
      $region24: #{forward.1} parent=19 // pred_fallthru
        _
    $region20: #{forward.1} parent=5 // pred_fallthru
      _
    %p113 = scmp.le.s32.totalorder 1, %s8
    %p114 = scmp.lt.s32.totalorder %s8, 5
    %p115 = pnand %p113, %p114
    %p116 = pneg %p115
    // Predicated region
    $region25: #{forward.1} parent=5 // pred_check
      _
    $region26: #{forward.1} parent=5 // pred_check_branch
      %118 = sbr.rel (%p115) target = $region28
    $region27: #{forward.1} parent=5 // pred_region
      %s119 = ssub.s32 %s8, 1
      %p120 = pneg %p29
      %p121 = pneg %p26
      %s122 = smul.u32 2, %s13
      %p123 = scmp.lt.s32.totalorder %s122, 7
      %s124 = scalar_select %p123, %s122, 7
      %s125 = smul.addr %s124, 3
      %s126 = smul.addr %s125, 4
      %s127 = scalar_lea.vmem %s1, %s126
      %p128 = pneg %p55
      %p129 = pneg %p52
      %p130 = pneg %p81
      %p131 = pneg %p78
      %s132 = smul.u32 2, %s13
      %p133 = scmp.lt.s32.totalorder %s132, 7
      %s134 = scalar_select %p133, %s132, 7
      %s135 = smul.addr %s134, 4
      %s136 = smul.addr %s135, 4
      %s137 = scalar_lea.vmem %s2, %s136
      %s138 = smul.u32 2, %s13
      %p139 = scmp.lt.s32.totalorder %s138, 7
      %s140 = scalar_select %p139, %s138, 7
      %s141 = smul.addr %s140, 3
      %s142 = smul.addr %s141, 4
      %s143 = scalar_lea.vmem %s1, %s142
      %s144 = smul.u32 2, %s13
      %s145 = smul.u32 2, %s13
      %p146 = scmp.lt.s32.totalorder %s145, 7
      %s147 = scalar_select %p146, %s145, 7
      %s148 = smul.addr %s147, 4
      %s149 = smul.addr %s148, 4
      %s150 = scalar_lea.vmem %s2, %s149
      %s151 = smul.u32 2, %s13
      %v153 = vld [vmem:[%s0] sm:$0xf]
      %v154 = vld [vmem:[%s0 + $0x4] sm:$0x1]
      %v155 = vld [vmem:[%s0 + $0x8] sm:$0xf]
      %v156 = vld [vmem:[%s0 + $0xc] sm:$0x1]
      %v157 = vld [vmem:[%s0 + $0x10] sm:$0xf]
      %v158 = vld [vmem:[%s0 + $0x14] sm:$0x1]
      %v159 = vld [vmem:[%s0 + $0x18] sm:$0xf]
      %v160 = vld [vmem:[%s0 + $0x1c] sm:$0x1]
      %v161 = vld [vmem:[%s0 + $0x20] sm:$0xf]
      %v162 = vld [vmem:[%s0 + $0x24] sm:$0x1]
      %v163 = vld [vmem:[%s0 + $0x28] sm:$0xf]
      %v164 = vld [vmem:[%s0 + $0x2c] sm:$0x1]
      %v165 = vld [vmem:[%s0 + $0x30] sm:$0xf]
      %v166 = vld [vmem:[%s0 + $0x34] sm:$0x1]
      %v167 = vld [vmem:[%s0 + $0x38] sm:$0xf]
      %v168 = vld [vmem:[%s0 + $0x3c] sm:$0x1]
      %v169 = vld [vmem:[%s0 + $0x40] sm:$0xf]
      %v170 = vld [vmem:[%s0 + $0x44] sm:$0x1]
      %v171 = vld [vmem:[%s143] sm:$0x77]
      %v172 = vld [vmem:[%s143 + $0x8] sm:$0x7]
      %v175 = vunpack.c.l.b16 %v155
      %v176 = vunpack.c.l.b16 %v156
      %v177 = vpack.c.b16 %v176, %v175
      %v180 = vunpack.c.l.b16 %v171
      %v181 = vunpack.c.h.b16 %v171
      %v182 = vunpack.c.l.b16 %v172
      %v183 = vpack.c.b16 %v180, %v180
      %v184 = vpack.c.b16 %v181, %v181
      %v185 = vpack.c.b16 %v182, %v182
      %186 = vrot.lane.b32.xlu0 %v183, 127
      %v187 = vpop.permute.xlu0 %186
      %188 = vrot.lane.b32.xlu0 %v184, 127
      %v189 = vpop.permute.xlu0 %188
      %190 = vrot.lane.b32.xlu0 %v185, 127
      %v191 = vpop.permute.xlu0 %190
      %vm192 = vcmask 1039360
      %v193 = vsel %vm192, %v187, %v189
      %v194 = vsel %vm192, %v189, %v191
      %vm195 = vcmask 48128
      %v197 = vsel %vm195, %v177, 0
      %vm199 = vcmask 1042432
      %v201 = vsel %vm199, %v193, 0
      %v204 = vsel %vm199, %v194, 0
      %v207 = vsel %vm199, %v191, 0
      %209 = vmatpush.bf16.msra.mxu0 0
      %210 = vmatpush.bf16.msra.mxu0 0
      %211 = vmatpush.bf16.msra.mxu0 0
      %212 = vmatpush.bf16.msra.mxu0 0
      %213 = vmatpush.bf16.msra.mxu0 0
      %214 = vmatpush.bf16.msra.mxu0 0
      %215 = vmatpush.bf16.msra.mxu0 0
      %216 = vmatpush.bf16.msra.mxu0 %v201
      %217 = vmatmul.bf16.gmra.mxu0 %v197
      %v218 = vpop.f32.mrf.mxu0
      %v219 = vadd.f32 0.0, %v218
      %v220 = vpop.f32.mrf.mxu0
      %v221 = vadd.f32 0.0, %v220
      %222 = vdwg.mxu0
      %223 = vmatpush.bf16.msra.mxu0 0
      %224 = vmatpush.bf16.msra.mxu0 0
      %225 = vmatpush.bf16.msra.mxu0 0
      %226 = vmatpush.bf16.msra.mxu0 0
      %227 = vmatpush.bf16.msra.mxu0 0
      %228 = vmatpush.bf16.msra.mxu0 0
      %229 = vmatpush.bf16.msra.mxu0 0
      %230 = vmatpush.bf16.msra.mxu0 %v204
      %231 = vmatmul.bf16.gmra.mxu0 %v197
      %v232 = vpop.f32.mrf.mxu0
      %v233 = vadd.f32 0.0, %v232
      %v234 = vpop.f32.mrf.mxu0
      %v235 = vadd.f32 0.0, %v234
      %236 = vdwg.mxu0
      %237 = vmatpush.bf16.msra.mxu0 0
      %238 = vmatpush.bf16.msra.mxu0 0
      %239 = vmatpush.bf16.msra.mxu0 0
      %240 = vmatpush.bf16.msra.mxu0 0
      %241 = vmatpush.bf16.msra.mxu0 0
      %242 = vmatpush.bf16.msra.mxu0 0
      %243 = vmatpush.bf16.msra.mxu0 0
      %244 = vmatpush.bf16.msra.mxu0 %v207
      %245 = vmatmul.bf16.gmra.mxu0 %v197
      %v246 = vpop.f32.mrf.mxu0
      %v247 = vadd.f32 0.0, %v246
      %v248 = vpop.f32.mrf.mxu0
      %v249 = vadd.f32 0.0, %v248
      %250 = vdwg.mxu0
      %v253 = vunpack.c.l.b16 %v153
      %v254 = vunpack.c.l.b16 %v154
      %v255 = vpack.c.b16 %v254, %v253
      %v257 = vsel %vm195, %v255, 0
      %v260 = vsel %vm199, %v183, 0
      %v263 = vsel %vm199, %v184, 0
      %v266 = vsel %vm199, %v185, 0
      %268 = vmatpush.bf16.msra.mxu0 0
      %269 = vmatpush.bf16.msra.mxu0 0
      %270 = vmatpush.bf16.msra.mxu0 0
      %271 = vmatpush.bf16.msra.mxu0 0
      %272 = vmatpush.bf16.msra.mxu0 0
      %273 = vmatpush.bf16.msra.mxu0 0
      %274 = vmatpush.bf16.msra.mxu0 0
      %275 = vmatpush.bf16.msra.mxu0 %v260
      %276 = vmatmul.bf16.gmra.mxu0 %v257
      %v277 = vpop.f32.mrf.mxu0
      %v278 = vadd.f32 %v219, %v277
      %v279 = vpop.f32.mrf.mxu0
      %v280 = vadd.f32 %v221, %v279
      %281 = vdwg.mxu0
      %282 = vmatpush.bf16.msra.mxu0 0
      %283 = vmatpush.bf16.msra.mxu0 0
      %284 = vmatpush.bf16.msra.mxu0 0
      %285 = vmatpush.bf16.msra.mxu0 0
      %286 = vmatpush.bf16.msra.mxu0 0
      %287 = vmatpush.bf16.msra.mxu0 0
      %288 = vmatpush.bf16.msra.mxu0 0
      %289 = vmatpush.bf16.msra.mxu0 %v263
      %290 = vmatmul.bf16.gmra.mxu0 %v257
      %v291 = vpop.f32.mrf.mxu0
      %v292 = vadd.f32 %v233, %v291
      %v293 = vpop.f32.mrf.mxu0
      %v294 = vadd.f32 %v235, %v293
      %295 = vdwg.mxu0
      %296 = vmatpush.bf16.msra.mxu0 0
      %297 = vmatpush.bf16.msra.mxu0 0
      %298 = vmatpush.bf16.msra.mxu0 0
      %299 = vmatpush.bf16.msra.mxu0 0
      %300 = vmatpush.bf16.msra.mxu0 0
      %301 = vmatpush.bf16.msra.mxu0 0
      %302 = vmatpush.bf16.msra.mxu0 0
      %303 = vmatpush.bf16.msra.mxu0 %v266
      %304 = vmatmul.bf16.gmra.mxu0 %v257
      %v305 = vpop.f32.mrf.mxu0
      %v306 = vadd.f32 %v247, %v305
      %v307 = vpop.f32.mrf.mxu0
      %v308 = vadd.f32 %v249, %v307
      %309 = vdwg.mxu0
      %v312 = vunpack.c.l.b16 %v157
      %v313 = vunpack.c.l.b16 %v158
      %v314 = vpack.c.b16 %v313, %v312
      %315 = vrot.lane.b32.xlu0 %v183, 126
      %v316 = vpop.permute.xlu0 %315
      %317 = vrot.lane.b32.xlu0 %v184, 126
      %v318 = vpop.permute.xlu0 %317
      %319 = vrot.lane.b32.xlu0 %v185, 126
      %v320 = vpop.permute.xlu0 %319
      %vm321 = vcmask 1031168
      %v322 = vsel %vm321, %v316, %v318
      %v323 = vsel %vm321, %v318, %v320
      %v325 = vsel %vm195, %v314, 0
      %v328 = vsel %vm199, %v322, 0
      %v331 = vsel %vm199, %v323, 0
      %v334 = vsel %vm199, %v320, 0
      %336 = vmatpush.bf16.msra.mxu0 0
      %337 = vmatpush.bf16.msra.mxu0 0
      %338 = vmatpush.bf16.msra.mxu0 0
      %339 = vmatpush.bf16.msra.mxu0 0
      %340 = vmatpush.bf16.msra.mxu0 0
      %341 = vmatpush.bf16.msra.mxu0 0
      %342 = vmatpush.bf16.msra.mxu0 0
      %343 = vmatpush.bf16.msra.mxu0 %v328
      %344 = vmatmul.bf16.gmra.mxu0 %v325
      %v345 = vpop.f32.mrf.mxu0
      %v346 = vadd.f32 0.0, %v345
      %v347 = vpop.f32.mrf.mxu0
      %v348 = vadd.f32 0.0, %v347
      %349 = vdwg.mxu0
      %350 = vmatpush.bf16.msra.mxu0 0
      %351 = vmatpush.bf16.msra.mxu0 0
      %352 = vmatpush.bf16.msra.mxu0 0
      %353 = vmatpush.bf16.msra.mxu0 0
      %354 = vmatpush.bf16.msra.mxu0 0
      %355 = vmatpush.bf16.msra.mxu0 0
      %356 = vmatpush.bf16.msra.mxu0 0
      %357 = vmatpush.bf16.msra.mxu0 %v331
      %358 = vmatmul.bf16.gmra.mxu0 %v325
      %v359 = vpop.f32.mrf.mxu0
      %v360 = vadd.f32 0.0, %v359
      %v361 = vpop.f32.mrf.mxu0
      %v362 = vadd.f32 0.0, %v361
      %363 = vdwg.mxu0
      %364 = vmatpush.bf16.msra.mxu0 0
      %365 = vmatpush.bf16.msra.mxu0 0
      %366 = vmatpush.bf16.msra.mxu0 0
      %367 = vmatpush.bf16.msra.mxu0 0
      %368 = vmatpush.bf16.msra.mxu0 0
      %369 = vmatpush.bf16.msra.mxu0 0
      %370 = vmatpush.bf16.msra.mxu0 0
      %371 = vmatpush.bf16.msra.mxu0 %v334
      %372 = vmatmul.bf16.gmra.mxu0 %v325
      %v373 = vpop.f32.mrf.mxu0
      %v374 = vadd.f32 0.0, %v373
      %v375 = vpop.f32.mrf.mxu0
      %v376 = vadd.f32 0.0, %v375
      %377 = vdwg.mxu0
      %v378 = vadd.f32 %v278, %v346
      %v379 = vadd.f32 %v292, %v360
      %v380 = vadd.f32 %v306, %v374
      %v381 = vadd.f32 %v280, %v348
      %v382 = vadd.f32 %v294, %v362
      %v383 = vadd.f32 %v308, %v376
      %v386 = vunpack.c.l.b16 %v159
      %v387 = vunpack.c.l.b16 %v160
      %v388 = vpack.c.b16 %v387, %v386
      %389 = vrot.lane.b32.xlu0 %v183, 110
      %v390 = vpop.permute.xlu0 %389
      %391 = vrot.lane.b32.xlu0 %v184, 110
      %v392 = vpop.permute.xlu0 %391
      %393 = vrot.lane.b32.xlu0 %v185, 110
      %v394 = vpop.permute.xlu0 %393
      %vm395 = vcmask 900096
      %v396 = vsel %vm395, %v390, %v392
      %v397 = vsel %vm395, %v392, %v394
      %v399 = vsel %vm195, %v388, 0
      %v402 = vsel %vm199, %v396, 0
      %v405 = vsel %vm199, %v397, 0
      %v408 = vsel %vm199, %v394, 0
      %410 = vmatpush.bf16.msra.mxu0 0
      %411 = vmatpush.bf16.msra.mxu0 0
      %412 = vmatpush.bf16.msra.mxu0 0
      %413 = vmatpush.bf16.msra.mxu0 0
      %414 = vmatpush.bf16.msra.mxu0 0
      %415 = vmatpush.bf16.msra.mxu0 0
      %416 = vmatpush.bf16.msra.mxu0 0
      %417 = vmatpush.bf16.msra.mxu0 %v402
      %418 = vmatmul.bf16.gmra.mxu0 %v399
      %v419 = vpop.f32.mrf.mxu0
      %v420 = vadd.f32 0.0, %v419
      %v421 = vpop.f32.mrf.mxu0
      %v422 = vadd.f32 0.0, %v421
      %423 = vdwg.mxu0
      %424 = vmatpush.bf16.msra.mxu0 0
      %425 = vmatpush.bf16.msra.mxu0 0
      %426 = vmatpush.bf16.msra.mxu0 0
      %427 = vmatpush.bf16.msra.mxu0 0
      %428 = vmatpush.bf16.msra.mxu0 0
      %429 = vmatpush.bf16.msra.mxu0 0
      %430 = vmatpush.bf16.msra.mxu0 0
      %431 = vmatpush.bf16.msra.mxu0 %v405
      %432 = vmatmul.bf16.gmra.mxu0 %v399
      %v433 = vpop.f32.mrf.mxu0
      %v434 = vadd.f32 0.0, %v433
      %v435 = vpop.f32.mrf.mxu0
      %v436 = vadd.f32 0.0, %v435
      %437 = vdwg.mxu0
      %438 = vmatpush.bf16.msra.mxu0 0
      %439 = vmatpush.bf16.msra.mxu0 0
      %440 = vmatpush.bf16.msra.mxu0 0
      %441 = vmatpush.bf16.msra.mxu0 0
      %442 = vmatpush.bf16.msra.mxu0 0
      %443 = vmatpush.bf16.msra.mxu0 0
      %444 = vmatpush.bf16.msra.mxu0 0
      %445 = vmatpush.bf16.msra.mxu0 %v408
      %446 = vmatmul.bf16.gmra.mxu0 %v399
      %v447 = vpop.f32.mrf.mxu0
      %v448 = vadd.f32 0.0, %v447
      %v449 = vpop.f32.mrf.mxu0
      %v450 = vadd.f32 0.0, %v449
      %451 = vdwg.mxu0
      %v452 = vadd.f32 %v378, %v420
      %v453 = vadd.f32 %v379, %v434
      %v454 = vadd.f32 %v380, %v448
      %v455 = vadd.f32 %v381, %v422
      %v456 = vadd.f32 %v382, %v436
      %v457 = vadd.f32 %v383, %v450
      %v460 = vunpack.c.l.b16 %v161
      %v461 = vunpack.c.l.b16 %v162
      %v462 = vpack.c.b16 %v461, %v460
      %463 = vrot.lane.b32.xlu0 %v183, 109
      %v464 = vpop.permute.xlu0 %463
      %465 = vrot.lane.b32.xlu0 %v184, 109
      %v466 = vpop.permute.xlu0 %465
      %467 = vrot.lane.b32.xlu0 %v185, 109
      %v468 = vpop.permute.xlu0 %467
      %vm469 = vcmask 891904
      %v470 = vsel %vm469, %v464, %v466
      %v471 = vsel %vm469, %v466, %v468
      %v473 = vsel %vm195, %v462, 0
      %v476 = vsel %vm199, %v470, 0
      %v479 = vsel %vm199, %v471, 0
      %v482 = vsel %vm199, %v468, 0
      %484 = vmatpush.bf16.msra.mxu0 0
      %485 = vmatpush.bf16.msra.mxu0 0
      %486 = vmatpush.bf16.msra.mxu0 0
      %487 = vmatpush.bf16.msra.mxu0 0
      %488 = vmatpush.bf16.msra.mxu0 0
      %489 = vmatpush.bf16.msra.mxu0 0
      %490 = vmatpush.bf16.msra.mxu0 0
      %491 = vmatpush.bf16.msra.mxu0 %v476
      %492 = vmatmul.bf16.gmra.mxu0 %v473
      %v493 = vpop.f32.mrf.mxu0
      %v494 = vadd.f32 0.0, %v493
      %v495 = vpop.f32.mrf.mxu0
      %v496 = vadd.f32 0.0, %v495
      %497 = vdwg.mxu0
      %498 = vmatpush.bf16.msra.mxu0 0
      %499 = vmatpush.bf16.msra.mxu0 0
      %500 = vmatpush.bf16.msra.mxu0 0
      %501 = vmatpush.bf16.msra.mxu0 0
      %502 = vmatpush.bf16.msra.mxu0 0
      %503 = vmatpush.bf16.msra.mxu0 0
      %504 = vmatpush.bf16.msra.mxu0 0
      %505 = vmatpush.bf16.msra.mxu0 %v479
      %506 = vmatmul.bf16.gmra.mxu0 %v473
      %v507 = vpop.f32.mrf.mxu0
      %v508 = vadd.f32 0.0, %v507
      %v509 = vpop.f32.mrf.mxu0
      %v510 = vadd.f32 0.0, %v509
      %511 = vdwg.mxu0
      %512 = vmatpush.bf16.msra.mxu0 0
      %513 = vmatpush.bf16.msra.mxu0 0
      %514 = vmatpush.bf16.msra.mxu0 0
      %515 = vmatpush.bf16.msra.mxu0 0
      %516 = vmatpush.bf16.msra.mxu0 0
      %517 = vmatpush.bf16.msra.mxu0 0
      %518 = vmatpush.bf16.msra.mxu0 0
      %519 = vmatpush.bf16.msra.mxu0 %v482
      %520 = vmatmul.bf16.gmra.mxu0 %v473
      %v521 = vpop.f32.mrf.mxu0
      %v522 = vadd.f32 0.0, %v521
      %v523 = vpop.f32.mrf.mxu0
      %v524 = vadd.f32 0.0, %v523
      %525 = vdwg.mxu0
      %v526 = vadd.f32 %v452, %v494
      %v527 = vadd.f32 %v453, %v508
      %v528 = vadd.f32 %v454, %v522
      %v529 = vadd.f32 %v455, %v496
      %v530 = vadd.f32 %v456, %v510
      %v531 = vadd.f32 %v457, %v524
      %v534 = vunpack.c.l.b16 %v163
      %v535 = vunpack.c.l.b16 %v164
      %v536 = vpack.c.b16 %v535, %v534
      %537 = vrot.lane.b32.xlu0 %v183, 108
      %v538 = vpop.permute.xlu0 %537
      %539 = vrot.lane.b32.xlu0 %v184, 108
      %v540 = vpop.permute.xlu0 %539
      %541 = vrot.lane.b32.xlu0 %v185, 108
      %v542 = vpop.permute.xlu0 %541
      %vm543 = vcmask 883712
      %v544 = vsel %vm543, %v538, %v540
      %v545 = vsel %vm543, %v540, %v542
      %v547 = vsel %vm195, %v536, 0
      %v550 = vsel %vm199, %v544, 0
      %v553 = vsel %vm199, %v545, 0
      %v556 = vsel %vm199, %v542, 0
      %558 = vmatpush.bf16.msra.mxu0 0
      %559 = vmatpush.bf16.msra.mxu0 0
      %560 = vmatpush.bf16.msra.mxu0 0
      %561 = vmatpush.bf16.msra.mxu0 0
      %562 = vmatpush.bf16.msra.mxu0 0
      %563 = vmatpush.bf16.msra.mxu0 0
      %564 = vmatpush.bf16.msra.mxu0 0
      %565 = vmatpush.bf16.msra.mxu0 %v550
      %566 = vmatmul.bf16.gmra.mxu0 %v547
      %v567 = vpop.f32.mrf.mxu0
      %v568 = vadd.f32 0.0, %v567
      %v569 = vpop.f32.mrf.mxu0
      %v570 = vadd.f32 0.0, %v569
      %571 = vdwg.mxu0
      %572 = vmatpush.bf16.msra.mxu0 0
      %573 = vmatpush.bf16.msra.mxu0 0
      %574 = vmatpush.bf16.msra.mxu0 0
      %575 = vmatpush.bf16.msra.mxu0 0
      %576 = vmatpush.bf16.msra.mxu0 0
      %577 = vmatpush.bf16.msra.mxu0 0
      %578 = vmatpush.bf16.msra.mxu0 0
      %579 = vmatpush.bf16.msra.mxu0 %v553
      %580 = vmatmul.bf16.gmra.mxu0 %v547
      %v581 = vpop.f32.mrf.mxu0
      %v582 = vadd.f32 0.0, %v581
      %v583 = vpop.f32.mrf.mxu0
      %v584 = vadd.f32 0.0, %v583
      %585 = vdwg.mxu0
      %586 = vmatpush.bf16.msra.mxu0 0
      %587 = vmatpush.bf16.msra.mxu0 0
      %588 = vmatpush.bf16.msra.mxu0 0
      %589 = vmatpush.bf16.msra.mxu0 0
      %590 = vmatpush.bf16.msra.mxu0 0
      %591 = vmatpush.bf16.msra.mxu0 0
      %592 = vmatpush.bf16.msra.mxu0 0
      %593 = vmatpush.bf16.msra.mxu0 %v556
      %594 = vmatmul.bf16.gmra.mxu0 %v547
      %v595 = vpop.f32.mrf.mxu0
      %v596 = vadd.f32 0.0, %v595
      %v597 = vpop.f32.mrf.mxu0
      %v598 = vadd.f32 0.0, %v597
      %599 = vdwg.mxu0
      %v600 = vadd.f32 %v526, %v568
      %v601 = vadd.f32 %v527, %v582
      %v602 = vadd.f32 %v528, %v596
      %v603 = vadd.f32 %v529, %v570
      %v604 = vadd.f32 %v530, %v584
      %v605 = vadd.f32 %v531, %v598
      %v608 = vunpack.c.l.b16 %v165
      %v609 = vunpack.c.l.b16 %v166
      %v610 = vpack.c.b16 %v609, %v608
      %611 = vrot.lane.b32.xlu0 %v183, 92
      %v612 = vpop.permute.xlu0 %611
      %613 = vrot.lane.b32.xlu0 %v184, 92
      %v614 = vpop.permute.xlu0 %613
      %615 = vrot.lane.b32.xlu0 %v185, 92
      %v616 = vpop.permute.xlu0 %615
      %vm617 = vcmask 752640
      %v618 = vsel %vm617, %v612, %v614
      %v619 = vsel %vm617, %v614, %v616
      %v621 = vsel %vm195, %v610, 0
      %v624 = vsel %vm199, %v618, 0
      %v627 = vsel %vm199, %v619, 0
      %v630 = vsel %vm199, %v616, 0
      %632 = vmatpush.bf16.msra.mxu0 0
      %633 = vmatpush.bf16.msra.mxu0 0
      %634 = vmatpush.bf16.msra.mxu0 0
      %635 = vmatpush.bf16.msra.mxu0 0
      %636 = vmatpush.bf16.msra.mxu0 0
      %637 = vmatpush.bf16.msra.mxu0 0
      %638 = vmatpush.bf16.msra.mxu0 0
      %639 = vmatpush.bf16.msra.mxu0 %v624
      %640 = vmatmul.bf16.gmra.mxu0 %v621
      %v641 = vpop.f32.mrf.mxu0
      %v642 = vadd.f32 0.0, %v641
      %v643 = vpop.f32.mrf.mxu0
      %v644 = vadd.f32 0.0, %v643
      %645 = vdwg.mxu0
      %646 = vmatpush.bf16.msra.mxu0 0
      %647 = vmatpush.bf16.msra.mxu0 0
      %648 = vmatpush.bf16.msra.mxu0 0
      %649 = vmatpush.bf16.msra.mxu0 0
      %650 = vmatpush.bf16.msra.mxu0 0
      %651 = vmatpush.bf16.msra.mxu0 0
      %652 = vmatpush.bf16.msra.mxu0 0
      %653 = vmatpush.bf16.msra.mxu0 %v627
      %654 = vmatmul.bf16.gmra.mxu0 %v621
      %v655 = vpop.f32.mrf.mxu0
      %v656 = vadd.f32 0.0, %v655
      %v657 = vpop.f32.mrf.mxu0
      %v658 = vadd.f32 0.0, %v657
      %659 = vdwg.mxu0
      %660 = vmatpush.bf16.msra.mxu0 0
      %661 = vmatpush.bf16.msra.mxu0 0
      %662 = vmatpush.bf16.msra.mxu0 0
      %663 = vmatpush.bf16.msra.mxu0 0
      %664 = vmatpush.bf16.msra.mxu0 0
      %665 = vmatpush.bf16.msra.mxu0 0
      %666 = vmatpush.bf16.msra.mxu0 0
      %667 = vmatpush.bf16.msra.mxu0 %v630
      %668 = vmatmul.bf16.gmra.mxu0 %v621
      %v669 = vpop.f32.mrf.mxu0
      %v670 = vadd.f32 0.0, %v669
      %v671 = vpop.f32.mrf.mxu0
      %v672 = vadd.f32 0.0, %v671
      %673 = vdwg.mxu0
      %v674 = vadd.f32 %v600, %v642
      %v675 = vadd.f32 %v601, %v656
      %v676 = vadd.f32 %v602, %v670
      %v677 = vadd.f32 %v603, %v644
      %v678 = vadd.f32 %v604, %v658
      %v679 = vadd.f32 %v605, %v672
      %v682 = vunpack.c.l.b16 %v167
      %v683 = vunpack.c.l.b16 %v168
      %v684 = vpack.c.b16 %v683, %v682
      %685 = vrot.lane.b32.xlu0 %v183, 91
      %v686 = vpop.permute.xlu0 %685
      %687 = vrot.lane.b32.xlu0 %v184, 91
      %v688 = vpop.permute.xlu0 %687
      %689 = vrot.lane.b32.xlu0 %v185, 91
      %v690 = vpop.permute.xlu0 %689
      %vm691 = vcmask 744448
      %v692 = vsel %vm691, %v686, %v688
      %v693 = vsel %vm691, %v688, %v690
      %v695 = vsel %vm195, %v684, 0
      %v698 = vsel %vm199, %v692, 0
      %v701 = vsel %vm199, %v693, 0
      %v704 = vsel %vm199, %v690, 0
      %706 = vmatpush.bf16.msra.mxu0 0
      %707 = vmatpush.bf16.msra.mxu0 0
      %708 = vmatpush.bf16.msra.mxu0 0
      %709 = vmatpush.bf16.msra.mxu0 0
      %710 = vmatpush.bf16.msra.mxu0 0
      %711 = vmatpush.bf16.msra.mxu0 0
      %712 = vmatpush.bf16.msra.mxu0 0
      %713 = vmatpush.bf16.msra.mxu0 %v698
      %714 = vmatmul.bf16.gmra.mxu0 %v695
      %v715 = vpop.f32.mrf.mxu0
      %v716 = vadd.f32 0.0, %v715
      %v717 = vpop.f32.mrf.mxu0
      %v718 = vadd.f32 0.0, %v717
      %719 = vdwg.mxu0
      %720 = vmatpush.bf16.msra.mxu0 0
      %721 = vmatpush.bf16.msra.mxu0 0
      %722 = vmatpush.bf16.msra.mxu0 0
      %723 = vmatpush.bf16.msra.mxu0 0
      %724 = vmatpush.bf16.msra.mxu0 0
      %725 = vmatpush.bf16.msra.mxu0 0
      %726 = vmatpush.bf16.msra.mxu0 0
      %727 = vmatpush.bf16.msra.mxu0 %v701
      %728 = vmatmul.bf16.gmra.mxu0 %v695
      %v729 = vpop.f32.mrf.mxu0
      %v730 = vadd.f32 0.0, %v729
      %v731 = vpop.f32.mrf.mxu0
      %v732 = vadd.f32 0.0, %v731
      %733 = vdwg.mxu0
      %734 = vmatpush.bf16.msra.mxu0 0
      %735 = vmatpush.bf16.msra.mxu0 0
      %736 = vmatpush.bf16.msra.mxu0 0
      %737 = vmatpush.bf16.msra.mxu0 0
      %738 = vmatpush.bf16.msra.mxu0 0
      %739 = vmatpush.bf16.msra.mxu0 0
      %740 = vmatpush.bf16.msra.mxu0 0
      %741 = vmatpush.bf16.msra.mxu0 %v704
      %742 = vmatmul.bf16.gmra.mxu0 %v695
      %v743 = vpop.f32.mrf.mxu0
      %v744 = vadd.f32 0.0, %v743
      %v745 = vpop.f32.mrf.mxu0
      %v746 = vadd.f32 0.0, %v745
      %747 = vdwg.mxu0
      %v748 = vadd.f32 %v674, %v716
      %v749 = vadd.f32 %v675, %v730
      %v750 = vadd.f32 %v676, %v744
      %v751 = vadd.f32 %v677, %v718
      %v752 = vadd.f32 %v678, %v732
      %v753 = vadd.f32 %v679, %v746
      %v756 = vunpack.c.l.b16 %v169
      %v757 = vunpack.c.l.b16 %v170
      %v758 = vpack.c.b16 %v757, %v756
      %759 = vrot.lane.b32.xlu0 %v183, 90
      %v760 = vpop.permute.xlu0 %759
      %761 = vrot.lane.b32.xlu0 %v184, 90
      %v762 = vpop.permute.xlu0 %761
      %763 = vrot.lane.b32.xlu0 %v185, 90
      %v764 = vpop.permute.xlu0 %763
      %vm765 = vcmask 736256
      %v766 = vsel %vm765, %v760, %v762
      %v767 = vsel %vm765, %v762, %v764
      %v769 = vsel %vm195, %v758, 0
      %v772 = vsel %vm199, %v766, 0
      %v775 = vsel %vm199, %v767, 0
      %v778 = vsel %vm199, %v764, 0
      %780 = vmatpush.bf16.msra.mxu0 0
      %781 = vmatpush.bf16.msra.mxu0 0
      %782 = vmatpush.bf16.msra.mxu0 0
      %783 = vmatpush.bf16.msra.mxu0 0
      %784 = vmatpush.bf16.msra.mxu0 0
      %785 = vmatpush.bf16.msra.mxu0 0
      %786 = vmatpush.bf16.msra.mxu0 0
      %787 = vmatpush.bf16.msra.mxu0 %v772
      %788 = vmatmul.bf16.gmra.mxu0 %v769
      %v789 = vpop.f32.mrf.mxu0
      %v790 = vadd.f32 0.0, %v789
      %v791 = vpop.f32.mrf.mxu0
      %v792 = vadd.f32 0.0, %v791
      %793 = vdwg.mxu0
      %794 = vmatpush.bf16.msra.mxu0 0
      %795 = vmatpush.bf16.msra.mxu0 0
      %796 = vmatpush.bf16.msra.mxu0 0
      %797 = vmatpush.bf16.msra.mxu0 0
      %798 = vmatpush.bf16.msra.mxu0 0
      %799 = vmatpush.bf16.msra.mxu0 0
      %800 = vmatpush.bf16.msra.mxu0 0
      %801 = vmatpush.bf16.msra.mxu0 %v775
      %802 = vmatmul.bf16.gmra.mxu0 %v769
      %v803 = vpop.f32.mrf.mxu0
      %v804 = vadd.f32 0.0, %v803
      %v805 = vpop.f32.mrf.mxu0
      %v806 = vadd.f32 0.0, %v805
      %807 = vdwg.mxu0
      %808 = vmatpush.bf16.msra.mxu0 0
      %809 = vmatpush.bf16.msra.mxu0 0
      %810 = vmatpush.bf16.msra.mxu0 0
      %811 = vmatpush.bf16.msra.mxu0 0
      %812 = vmatpush.bf16.msra.mxu0 0
      %813 = vmatpush.bf16.msra.mxu0 0
      %814 = vmatpush.bf16.msra.mxu0 0
      %815 = vmatpush.bf16.msra.mxu0 %v778
      %816 = vmatmul.bf16.gmra.mxu0 %v769
      %v817 = vpop.f32.mrf.mxu0
      %v818 = vadd.f32 0.0, %v817
      %v819 = vpop.f32.mrf.mxu0
      %v820 = vadd.f32 0.0, %v819
      %821 = vdwg.mxu0
      %v822 = vadd.f32 %v748, %v790
      %v823 = vadd.f32 %v749, %v804
      %v824 = vadd.f32 %v750, %v818
      %v825 = vadd.f32 %v751, %v792
      %v826 = vadd.f32 %v752, %v806
      %v827 = vadd.f32 %v753, %v820
      %830 = vrot.lane.b32.xlu0 %v822, 126
      %v831 = vpop.permute.xlu0 %830
      %832 = vrot.lane.b32.xlu0 %v825, 126
      %v833 = vpop.permute.xlu0 %832
      %836 = vrot.lane.b32.xlu0 %v822, 124
      %v837 = vpop.permute.xlu0 %836
      %838 = vrot.lane.b32.xlu0 %v825, 124
      %v839 = vpop.permute.xlu0 %838
      %842 = vrot.lane.b32.xlu0 %v822, 122
      %v843 = vpop.permute.xlu0 %842
      %844 = vrot.lane.b32.xlu0 %v825, 122
      %v845 = vpop.permute.xlu0 %844
      %848 = vrot.lane.b32.xlu0 %v822, 120
      %v849 = vpop.permute.xlu0 %848
      %850 = vrot.lane.b32.xlu0 %v825, 120
      %v851 = vpop.permute.xlu0 %850
      %854 = vrot.lane.b32.xlu0 %v822, 118
      %v855 = vpop.permute.xlu0 %854
      %856 = vrot.lane.b32.xlu0 %v825, 118
      %v857 = vpop.permute.xlu0 %856
      %860 = vrot.lane.b32.xlu0 %v822, 116
      %v861 = vpop.permute.xlu0 %860
      %862 = vrot.lane.b32.xlu0 %v825, 116
      %v863 = vpop.permute.xlu0 %862
      %868 = vrot.lane.b32.xlu0 %v822, 114
      %v869 = vpop.permute.xlu0 %868
      %870 = vrot.lane.b32.xlu0 %v823, 114
      %v871 = vpop.permute.xlu0 %870
      %872 = vrot.lane.b32.xlu0 %v825, 114
      %v873 = vpop.permute.xlu0 %872
      %874 = vrot.lane.b32.xlu0 %v826, 114
      %v875 = vpop.permute.xlu0 %874
      %vm876 = vcmask 932864
      %v877 = vsel %vm876, %v869, %v871
      %v878 = vsel %vm876, %v873, %v875
      %881 = vrot.lane.b32.xlu0 %v823, 112
      %v882 = vpop.permute.xlu0 %881
      %883 = vrot.lane.b32.xlu0 %v826, 112
      %v884 = vpop.permute.xlu0 %883
      %887 = vrot.lane.b32.xlu0 %v823, 110
      %v888 = vpop.permute.xlu0 %887
      %889 = vrot.lane.b32.xlu0 %v826, 110
      %v890 = vpop.permute.xlu0 %889
      %893 = vrot.lane.b32.xlu0 %v823, 108
      %v894 = vpop.permute.xlu0 %893
      %895 = vrot.lane.b32.xlu0 %v826, 108
      %v896 = vpop.permute.xlu0 %895
      %899 = vrot.lane.b32.xlu0 %v823, 106
      %v900 = vpop.permute.xlu0 %899
      %901 = vrot.lane.b32.xlu0 %v826, 106
      %v902 = vpop.permute.xlu0 %901
      %905 = vrot.lane.b32.xlu0 %v823, 104
      %v906 = vpop.permute.xlu0 %905
      %907 = vrot.lane.b32.xlu0 %v826, 104
      %v908 = vpop.permute.xlu0 %907
      %911 = vrot.lane.b32.xlu0 %v823, 102
      %v912 = vpop.permute.xlu0 %911
      %913 = vrot.lane.b32.xlu0 %v826, 102
      %v914 = vpop.permute.xlu0 %913
      %919 = vrot.lane.b32.xlu0 %v823, 100
      %v920 = vpop.permute.xlu0 %919
      %921 = vrot.lane.b32.xlu0 %v824, 100
      %v922 = vpop.permute.xlu0 %921
      %923 = vrot.lane.b32.xlu0 %v826, 100
      %v924 = vpop.permute.xlu0 %923
      %925 = vrot.lane.b32.xlu0 %v827, 100
      %v926 = vpop.permute.xlu0 %925
      %vm927 = vcmask 818176
      %v928 = vsel %vm927, %v920, %v922
      %v929 = vsel %vm927, %v924, %v926
      %932 = vrot.lane.b32.xlu0 %v824, 98
      %v933 = vpop.permute.xlu0 %932
      %934 = vrot.lane.b32.xlu0 %v827, 98
      %v935 = vpop.permute.xlu0 %934
      %vm938 = vcmask 130048
      %v939 = vsel %vm938, %v822, %v831
      %v940 = vsel %vm938, %v825, %v833
      %vm941 = vcmask 261120
      %v942 = vsel %vm941, %v939, %v837
      %v943 = vsel %vm941, %v940, %v839
      %vm944 = vcmask 392192
      %v945 = vsel %vm944, %v942, %v843
      %v946 = vsel %vm944, %v943, %v845
      %vm947 = vcmask 523264
      %v948 = vsel %vm947, %v945, %v849
      %v949 = vsel %vm947, %v946, %v851
      %vm950 = vcmask 654336
      %v951 = vsel %vm950, %v948, %v855
      %v952 = vsel %vm950, %v949, %v857
      %vm953 = vcmask 785408
      %v954 = vsel %vm953, %v951, %v861
      %v955 = vsel %vm953, %v952, %v863
      %vm956 = vcmask 916480
      %v957 = vsel %vm956, %v954, %v877
      %v958 = vsel %vm956, %v955, %v878
      %v959 = vsel %vm938, %v882, %v888
      %v960 = vsel %vm938, %v884, %v890
      %v961 = vsel %vm941, %v959, %v894
      %v962 = vsel %vm941, %v960, %v896
      %v963 = vsel %vm944, %v961, %v900
      %v964 = vsel %vm944, %v962, %v902
      %v965 = vsel %vm947, %v963, %v906
      %v966 = vsel %vm947, %v964, %v908
      %v967 = vsel %vm950, %v965, %v912
      %v968 = vsel %vm950, %v966, %v914
      %v969 = vsel %vm953, %v967, %v928
      %v970 = vsel %vm953, %v968, %v929
      %v971 = vsel %vm956, %v969, %v933
      %v972 = vsel %vm956, %v970, %v935
      %v973 = vpack.c.bf16 %v971, %v957
      %v974 = vpack.c.bf16 %v972, %v958
      %975 = vst [vmem:[%s150] sm:$0xff] %v973
      %vm976 = vcmask 1040384
      %vm977 = vsmask.f32 256
      %vm978 = vmand %vm976, %vm977
      %vm979 = vcmask 1044484
      %vm980 = vsmask.f32 4352
      %vm981 = vmand %vm979, %vm980
      %vm982 = vmor %vm981, %vm978
      %v983 = vld [vmem:[%s150 + $0x8] sm:$0x11]
      %v984 = vsel %vm982, %v974, %v983
      %985 = vst [vmem:[%s150 + $0x8] sm:$0x11] %v984
      %s986 = scalar_lea.vmem %s143, 12
      %v987 = vld [vmem:[%s986] sm:$0x77]
      %v988 = vld [vmem:[%s986 + $0x8] sm:$0x7]
      %v991 = vunpack.c.l.b16 %v987
      %v992 = vunpack.c.h.b16 %v987
      %v993 = vunpack.c.l.b16 %v988
      %v994 = vpack.c.b16 %v991, %v991
      %v995 = vpack.c.b16 %v992, %v992
      %v996 = vpack.c.b16 %v993, %v993
      %997 = vrot.lane.b32.xlu0 %v994, 127
      %v998 = vpop.permute.xlu0 %997
      %999 = vrot.lane.b32.xlu0 %v995, 127
      %v1000 = vpop.permute.xlu0 %999
      %1001 = vrot.lane.b32.xlu0 %v996, 127
      %v1002 = vpop.permute.xlu0 %1001
      %v1003 = vsel %vm192, %v998, %v1000
      %v1004 = vsel %vm192, %v1000, %v1002
      %v1006 = vsel %vm199, %v1003, 0
      %v1009 = vsel %vm199, %v1004, 0
      %v1012 = vsel %vm199, %v1002, 0
      %1014 = vmatpush.bf16.msra.mxu0 0
      %1015 = vmatpush.bf16.msra.mxu0 0
      %1016 = vmatpush.bf16.msra.mxu0 0
      %1017 = vmatpush.bf16.msra.mxu0 0
      %1018 = vmatpush.bf16.msra.mxu0 0
      %1019 = vmatpush.bf16.msra.mxu0 0
      %1020 = vmatpush.bf16.msra.mxu0 0
      %1021 = vmatpush.bf16.msra.mxu0 %v1006
      %1022 = vmatmul.bf16.gmra.mxu0 %v197
      %v1023 = vpop.f32.mrf.mxu0
      %v1024 = vadd.f32 0.0, %v1023
      %v1025 = vpop.f32.mrf.mxu0
      %v1026 = vadd.f32 0.0, %v1025
      %1027 = vdwg.mxu0
      %1028 = vmatpush.bf16.msra.mxu0 0
      %1029 = vmatpush.bf16.msra.mxu0 0
      %1030 = vmatpush.bf16.msra.mxu0 0
      %1031 = vmatpush.bf16.msra.mxu0 0
      %1032 = vmatpush.bf16.msra.mxu0 0
      %1033 = vmatpush.bf16.msra.mxu0 0
      %1034 = vmatpush.bf16.msra.mxu0 0
      %1035 = vmatpush.bf16.msra.mxu0 %v1009
      %1036 = vmatmul.bf16.gmra.mxu0 %v197
      %v1037 = vpop.f32.mrf.mxu0
      %v1038 = vadd.f32 0.0, %v1037
      %v1039 = vpop.f32.mrf.mxu0
      %v1040 = vadd.f32 0.0, %v1039
      %1041 = vdwg.mxu0
      %1042 = vmatpush.bf16.msra.mxu0 0
      %1043 = vmatpush.bf16.msra.mxu0 0
      %1044 = vmatpush.bf16.msra.mxu0 0
      %1045 = vmatpush.bf16.msra.mxu0 0
      %1046 = vmatpush.bf16.msra.mxu0 0
      %1047 = vmatpush.bf16.msra.mxu0 0
      %1048 = vmatpush.bf16.msra.mxu0 0
      %1049 = vmatpush.bf16.msra.mxu0 %v1012
      %1050 = vmatmul.bf16.gmra.mxu0 %v197
      %v1051 = vpop.f32.mrf.mxu0
      %v1052 = vadd.f32 0.0, %v1051
      %v1053 = vpop.f32.mrf.mxu0
      %v1054 = vadd.f32 0.0, %v1053
      %1055 = vdwg.mxu0
      %v1057 = vsel %vm199, %v994, 0
      %v1060 = vsel %vm199, %v995, 0
      %v1063 = vsel %vm199, %v996, 0
      %1065 = vmatpush.bf16.msra.mxu0 0
      %1066 = vmatpush.bf16.msra.mxu0 0
      %1067 = vmatpush.bf16.msra.mxu0 0
      %1068 = vmatpush.bf16.msra.mxu0 0
      %1069 = vmatpush.bf16.msra.mxu0 0
      %1070 = vmatpush.bf16.msra.mxu0 0
      %1071 = vmatpush.bf16.msra.mxu0 0
      %1072 = vmatpush.bf16.msra.mxu0 %v1057
      %1073 = vmatmul.bf16.gmra.mxu0 %v257
      %v1074 = vpop.f32.mrf.mxu0
      %v1075 = vadd.f32 %v1024, %v1074
      %v1076 = vpop.f32.mrf.mxu0
      %v1077 = vadd.f32 %v1026, %v1076
      %1078 = vdwg.mxu0
      %1079 = vmatpush.bf16.msra.mxu0 0
      %1080 = vmatpush.bf16.msra.mxu0 0
      %1081 = vmatpush.bf16.msra.mxu0 0
      %1082 = vmatpush.bf16.msra.mxu0 0
      %1083 = vmatpush.bf16.msra.mxu0 0
      %1084 = vmatpush.bf16.msra.mxu0 0
      %1085 = vmatpush.bf16.msra.mxu0 0
      %1086 = vmatpush.bf16.msra.mxu0 %v1060
      %1087 = vmatmul.bf16.gmra.mxu0 %v257
      %v1088 = vpop.f32.mrf.mxu0
      %v1089 = vadd.f32 %v1038, %v1088
      %v1090 = vpop.f32.mrf.mxu0
      %v1091 = vadd.f32 %v1040, %v1090
      %1092 = vdwg.mxu0
      %1093 = vmatpush.bf16.msra.mxu0 0
      %1094 = vmatpush.bf16.msra.mxu0 0
      %1095 = vmatpush.bf16.msra.mxu0 0
      %1096 = vmatpush.bf16.msra.mxu0 0
      %1097 = vmatpush.bf16.msra.mxu0 0
      %1098 = vmatpush.bf16.msra.mxu0 0
      %1099 = vmatpush.bf16.msra.mxu0 0
      %1100 = vmatpush.bf16.msra.mxu0 %v1063
      %1101 = vmatmul.bf16.gmra.mxu0 %v257
      %v1102 = vpop.f32.mrf.mxu0
      %v1103 = vadd.f32 %v1052, %v1102
      %v1104 = vpop.f32.mrf.mxu0
      %v1105 = vadd.f32 %v1054, %v1104
      %1106 = vdwg.mxu0
      %1107 = vrot.lane.b32.xlu0 %v994, 126
      %v1108 = vpop.permute.xlu0 %1107
      %1109 = vrot.lane.b32.xlu0 %v995, 126
      %v1110 = vpop.permute.xlu0 %1109
      %1111 = vrot.lane.b32.xlu0 %v996, 126
      %v1112 = vpop.permute.xlu0 %1111
      %v1113 = vsel %vm321, %v1108, %v1110
      %v1114 = vsel %vm321, %v1110, %v1112
      %v1116 = vsel %vm199, %v1113, 0
      %v1119 = vsel %vm199, %v1114, 0
      %v1122 = vsel %vm199, %v1112, 0
      %1124 = vmatpush.bf16.msra.mxu0 0
      %1125 = vmatpush.bf16.msra.mxu0 0
      %1126 = vmatpush.bf16.msra.mxu0 0
      %1127 = vmatpush.bf16.msra.mxu0 0
      %1128 = vmatpush.bf16.msra.mxu0 0
      %1129 = vmatpush.bf16.msra.mxu0 0
      %1130 = vmatpush.bf16.msra.mxu0 0
      %1131 = vmatpush.bf16.msra.mxu0 %v1116
      %1132 = vmatmul.bf16.gmra.mxu0 %v325
      %v1133 = vpop.f32.mrf.mxu0
      %v1134 = vadd.f32 0.0, %v1133
      %v1135 = vpop.f32.mrf.mxu0
      %v1136 = vadd.f32 0.0, %v1135
      %1137 = vdwg.mxu0
      %1138 = vmatpush.bf16.msra.mxu0 0
      %1139 = vmatpush.bf16.msra.mxu0 0
      %1140 = vmatpush.bf16.msra.mxu0 0
      %1141 = vmatpush.bf16.msra.mxu0 0
      %1142 = vmatpush.bf16.msra.mxu0 0
      %1143 = vmatpush.bf16.msra.mxu0 0
      %1144 = vmatpush.bf16.msra.mxu0 0
      %1145 = vmatpush.bf16.msra.mxu0 %v1119
      %1146 = vmatmul.bf16.gmra.mxu0 %v325
      %v1147 = vpop.f32.mrf.mxu0
      %v1148 = vadd.f32 0.0, %v1147
      %v1149 = vpop.f32.mrf.mxu0
      %v1150 = vadd.f32 0.0, %v1149
      %1151 = vdwg.mxu0
      %1152 = vmatpush.bf16.msra.mxu0 0
      %1153 = vmatpush.bf16.msra.mxu0 0
      %1154 = vmatpush.bf16.msra.mxu0 0
      %1155 = vmatpush.bf16.msra.mxu0 0
      %1156 = vmatpush.bf16.msra.mxu0 0
      %1157 = vmatpush.bf16.msra.mxu0 0
      %1158 = vmatpush.bf16.msra.mxu0 0
      %1159 = vmatpush.bf16.msra.mxu0 %v1122
      %1160 = vmatmul.bf16.gmra.mxu0 %v325
      %v1161 = vpop.f32.mrf.mxu0
      %v1162 = vadd.f32 0.0, %v1161
      %v1163 = vpop.f32.mrf.mxu0
      %v1164 = vadd.f32 0.0, %v1163
      %1165 = vdwg.mxu0
      %v1166 = vadd.f32 %v1075, %v1134
      %v1167 = vadd.f32 %v1089, %v1148
      %v1168 = vadd.f32 %v1103, %v1162
      %v1169 = vadd.f32 %v1077, %v1136
      %v1170 = vadd.f32 %v1091, %v1150
      %v1171 = vadd.f32 %v1105, %v1164
      %1172 = vrot.lane.b32.xlu0 %v994, 110
      %v1173 = vpop.permute.xlu0 %1172
      %1174 = vrot.lane.b32.xlu0 %v995, 110
      %v1175 = vpop.permute.xlu0 %1174
      %1176 = vrot.lane.b32.xlu0 %v996, 110
      %v1177 = vpop.permute.xlu0 %1176
      %v1178 = vsel %vm395, %v1173, %v1175
      %v1179 = vsel %vm395, %v1175, %v1177
      %v1181 = vsel %vm199, %v1178, 0
      %v1184 = vsel %vm199, %v1179, 0
      %v1187 = vsel %vm199, %v1177, 0
      %1189 = vmatpush.bf16.msra.mxu0 0
      %1190 = vmatpush.bf16.msra.mxu0 0
      %1191 = vmatpush.bf16.msra.mxu0 0
      %1192 = vmatpush.bf16.msra.mxu0 0
      %1193 = vmatpush.bf16.msra.mxu0 0
      %1194 = vmatpush.bf16.msra.mxu0 0
      %1195 = vmatpush.bf16.msra.mxu0 0
      %1196 = vmatpush.bf16.msra.mxu0 %v1181
      %1197 = vmatmul.bf16.gmra.mxu0 %v399
      %v1198 = vpop.f32.mrf.mxu0
      %v1199 = vadd.f32 0.0, %v1198
      %v1200 = vpop.f32.mrf.mxu0
      %v1201 = vadd.f32 0.0, %v1200
      %1202 = vdwg.mxu0
      %1203 = vmatpush.bf16.msra.mxu0 0
      %1204 = vmatpush.bf16.msra.mxu0 0
      %1205 = vmatpush.bf16.msra.mxu0 0
      %1206 = vmatpush.bf16.msra.mxu0 0
      %1207 = vmatpush.bf16.msra.mxu0 0
      %1208 = vmatpush.bf16.msra.mxu0 0
      %1209 = vmatpush.bf16.msra.mxu0 0
      %1210 = vmatpush.bf16.msra.mxu0 %v1184
      %1211 = vmatmul.bf16.gmra.mxu0 %v399
      %v1212 = vpop.f32.mrf.mxu0
      %v1213 = vadd.f32 0.0, %v1212
      %v1214 = vpop.f32.mrf.mxu0
      %v1215 = vadd.f32 0.0, %v1214
      %1216 = vdwg.mxu0
      %1217 = vmatpush.bf16.msra.mxu0 0
      %1218 = vmatpush.bf16.msra.mxu0 0
      %1219 = vmatpush.bf16.msra.mxu0 0
      %1220 = vmatpush.bf16.msra.mxu0 0
      %1221 = vmatpush.bf16.msra.mxu0 0
      %1222 = vmatpush.bf16.msra.mxu0 0
      %1223 = vmatpush.bf16.msra.mxu0 0
      %1224 = vmatpush.bf16.msra.mxu0 %v1187
      %1225 = vmatmul.bf16.gmra.mxu0 %v399
      %v1226 = vpop.f32.mrf.mxu0
      %v1227 = vadd.f32 0.0, %v1226
      %v1228 = vpop.f32.mrf.mxu0
      %v1229 = vadd.f32 0.0, %v1228
      %1230 = vdwg.mxu0
      %v1231 = vadd.f32 %v1166, %v1199
      %v1232 = vadd.f32 %v1167, %v1213
      %v1233 = vadd.f32 %v1168, %v1227
      %v1234 = vadd.f32 %v1169, %v1201
      %v1235 = vadd.f32 %v1170, %v1215
      %v1236 = vadd.f32 %v1171, %v1229
      %1237 = vrot.lane.b32.xlu0 %v994, 109
      %v1238 = vpop.permute.xlu0 %1237
      %1239 = vrot.lane.b32.xlu0 %v995, 109
      %v1240 = vpop.permute.xlu0 %1239
      %1241 = vrot.lane.b32.xlu0 %v996, 109
      %v1242 = vpop.permute.xlu0 %1241
      %v1243 = vsel %vm469, %v1238, %v1240
      %v1244 = vsel %vm469, %v1240, %v1242
      %v1246 = vsel %vm199, %v1243, 0
      %v1249 = vsel %vm199, %v1244, 0
      %v1252 = vsel %vm199, %v1242, 0
      %1254 = vmatpush.bf16.msra.mxu0 0
      %1255 = vmatpush.bf16.msra.mxu0 0
      %1256 = vmatpush.bf16.msra.mxu0 0
      %1257 = vmatpush.bf16.msra.mxu0 0
      %1258 = vmatpush.bf16.msra.mxu0 0
      %1259 = vmatpush.bf16.msra.mxu0 0
      %1260 = vmatpush.bf16.msra.mxu0 0
      %1261 = vmatpush.bf16.msra.mxu0 %v1246
      %1262 = vmatmul.bf16.gmra.mxu0 %v473
      %v1263 = vpop.f32.mrf.mxu0
      %v1264 = vadd.f32 0.0, %v1263
      %v1265 = vpop.f32.mrf.mxu0
      %v1266 = vadd.f32 0.0, %v1265
      %1267 = vdwg.mxu0
      %1268 = vmatpush.bf16.msra.mxu0 0
      %1269 = vmatpush.bf16.msra.mxu0 0
      %1270 = vmatpush.bf16.msra.mxu0 0
      %1271 = vmatpush.bf16.msra.mxu0 0
      %1272 = vmatpush.bf16.msra.mxu0 0
      %1273 = vmatpush.bf16.msra.mxu0 0
      %1274 = vmatpush.bf16.msra.mxu0 0
      %1275 = vmatpush.bf16.msra.mxu0 %v1249
      %1276 = vmatmul.bf16.gmra.mxu0 %v473
      %v1277 = vpop.f32.mrf.mxu0
      %v1278 = vadd.f32 0.0, %v1277
      %v1279 = vpop.f32.mrf.mxu0
      %v1280 = vadd.f32 0.0, %v1279
      %1281 = vdwg.mxu0
      %1282 = vmatpush.bf16.msra.mxu0 0
      %1283 = vmatpush.bf16.msra.mxu0 0
      %1284 = vmatpush.bf16.msra.mxu0 0
      %1285 = vmatpush.bf16.msra.mxu0 0
      %1286 = vmatpush.bf16.msra.mxu0 0
      %1287 = vmatpush.bf16.msra.mxu0 0
      %1288 = vmatpush.bf16.msra.mxu0 0
      %1289 = vmatpush.bf16.msra.mxu0 %v1252
      %1290 = vmatmul.bf16.gmra.mxu0 %v473
      %v1291 = vpop.f32.mrf.mxu0
      %v1292 = vadd.f32 0.0, %v1291
      %v1293 = vpop.f32.mrf.mxu0
      %v1294 = vadd.f32 0.0, %v1293
      %1295 = vdwg.mxu0
      %v1296 = vadd.f32 %v1231, %v1264
      %v1297 = vadd.f32 %v1232, %v1278
      %v1298 = vadd.f32 %v1233, %v1292
      %v1299 = vadd.f32 %v1234, %v1266
      %v1300 = vadd.f32 %v1235, %v1280
      %v1301 = vadd.f32 %v1236, %v1294
      %1302 = vrot.lane.b32.xlu0 %v994, 108
      %v1303 = vpop.permute.xlu0 %1302
      %1304 = vrot.lane.b32.xlu0 %v995, 108
      %v1305 = vpop.permute.xlu0 %1304
      %1306 = vrot.lane.b32.xlu0 %v996, 108
      %v1307 = vpop.permute.xlu0 %1306
      %v1308 = vsel %vm543, %v1303, %v1305
      %v1309 = vsel %vm543, %v1305, %v1307
      %v1311 = vsel %vm199, %v1308, 0
      %v1314 = vsel %vm199, %v1309, 0
      %v1317 = vsel %vm199, %v1307, 0
      %1319 = vmatpush.bf16.msra.mxu0 0
      %1320 = vmatpush.bf16.msra.mxu0 0
      %1321 = vmatpush.bf16.msra.mxu0 0
      %1322 = vmatpush.bf16.msra.mxu0 0
      %1323 = vmatpush.bf16.msra.mxu0 0
      %1324 = vmatpush.bf16.msra.mxu0 0
      %1325 = vmatpush.bf16.msra.mxu0 0
      %1326 = vmatpush.bf16.msra.mxu0 %v1311
      %1327 = vmatmul.bf16.gmra.mxu0 %v547
      %v1328 = vpop.f32.mrf.mxu0
      %v1329 = vadd.f32 0.0, %v1328
      %v1330 = vpop.f32.mrf.mxu0
      %v1331 = vadd.f32 0.0, %v1330
      %1332 = vdwg.mxu0
      %1333 = vmatpush.bf16.msra.mxu0 0
      %1334 = vmatpush.bf16.msra.mxu0 0
      %1335 = vmatpush.bf16.msra.mxu0 0
      %1336 = vmatpush.bf16.msra.mxu0 0
      %1337 = vmatpush.bf16.msra.mxu0 0
      %1338 = vmatpush.bf16.msra.mxu0 0
      %1339 = vmatpush.bf16.msra.mxu0 0
      %1340 = vmatpush.bf16.msra.mxu0 %v1314
      %1341 = vmatmul.bf16.gmra.mxu0 %v547
      %v1342 = vpop.f32.mrf.mxu0
      %v1343 = vadd.f32 0.0, %v1342
      %v1344 = vpop.f32.mrf.mxu0
      %v1345 = vadd.f32 0.0, %v1344
      %1346 = vdwg.mxu0
      %1347 = vmatpush.bf16.msra.mxu0 0
      %1348 = vmatpush.bf16.msra.mxu0 0
      %1349 = vmatpush.bf16.msra.mxu0 0
      %1350 = vmatpush.bf16.msra.mxu0 0
      %1351 = vmatpush.bf16.msra.mxu0 0
      %1352 = vmatpush.bf16.msra.mxu0 0
      %1353 = vmatpush.bf16.msra.mxu0 0
      %1354 = vmatpush.bf16.msra.mxu0 %v1317
      %1355 = vmatmul.bf16.gmra.mxu0 %v547
      %v1356 = vpop.f32.mrf.mxu0
      %v1357 = vadd.f32 0.0, %v1356
      %v1358 = vpop.f32.mrf.mxu0
      %v1359 = vadd.f32 0.0, %v1358
      %1360 = vdwg.mxu0
      %v1361 = vadd.f32 %v1296, %v1329
      %v1362 = vadd.f32 %v1297, %v1343
      %v1363 = vadd.f32 %v1298, %v1357
      %v1364 = vadd.f32 %v1299, %v1331
      %v1365 = vadd.f32 %v1300, %v1345
      %v1366 = vadd.f32 %v1301, %v1359
      %1367 = vrot.lane.b32.xlu0 %v994, 92
      %v1368 = vpop.permute.xlu0 %1367
      %1369 = vrot.lane.b32.xlu0 %v995, 92
      %v1370 = vpop.permute.xlu0 %1369
      %1371 = vrot.lane.b32.xlu0 %v996, 92
      %v1372 = vpop.permute.xlu0 %1371
      %v1373 = vsel %vm617, %v1368, %v1370
      %v1374 = vsel %vm617, %v1370, %v1372
      %v1376 = vsel %vm199, %v1373, 0
      %v1379 = vsel %vm199, %v1374, 0
      %v1382 = vsel %vm199, %v1372, 0
      %1384 = vmatpush.bf16.msra.mxu0 0
      %1385 = vmatpush.bf16.msra.mxu0 0
      %1386 = vmatpush.bf16.msra.mxu0 0
      %1387 = vmatpush.bf16.msra.mxu0 0
      %1388 = vmatpush.bf16.msra.mxu0 0
      %1389 = vmatpush.bf16.msra.mxu0 0
      %1390 = vmatpush.bf16.msra.mxu0 0
      %1391 = vmatpush.bf16.msra.mxu0 %v1376
      %1392 = vmatmul.bf16.gmra.mxu0 %v621
      %v1393 = vpop.f32.mrf.mxu0
      %v1394 = vadd.f32 0.0, %v1393
      %v1395 = vpop.f32.mrf.mxu0
      %v1396 = vadd.f32 0.0, %v1395
      %1397 = vdwg.mxu0
      %1398 = vmatpush.bf16.msra.mxu0 0
      %1399 = vmatpush.bf16.msra.mxu0 0
      %1400 = vmatpush.bf16.msra.mxu0 0
      %1401 = vmatpush.bf16.msra.mxu0 0
      %1402 = vmatpush.bf16.msra.mxu0 0
      %1403 = vmatpush.bf16.msra.mxu0 0
      %1404 = vmatpush.bf16.msra.mxu0 0
      %1405 = vmatpush.bf16.msra.mxu0 %v1379
      %1406 = vmatmul.bf16.gmra.mxu0 %v621
      %v1407 = vpop.f32.mrf.mxu0
      %v1408 = vadd.f32 0.0, %v1407
      %v1409 = vpop.f32.mrf.mxu0
      %v1410 = vadd.f32 0.0, %v1409
      %1411 = vdwg.mxu0
      %1412 = vmatpush.bf16.msra.mxu0 0
      %1413 = vmatpush.bf16.msra.mxu0 0
      %1414 = vmatpush.bf16.msra.mxu0 0
      %1415 = vmatpush.bf16.msra.mxu0 0
      %1416 = vmatpush.bf16.msra.mxu0 0
      %1417 = vmatpush.bf16.msra.mxu0 0
      %1418 = vmatpush.bf16.msra.mxu0 0
      %1419 = vmatpush.bf16.msra.mxu0 %v1382
      %1420 = vmatmul.bf16.gmra.mxu0 %v621
      %v1421 = vpop.f32.mrf.mxu0
      %v1422 = vadd.f32 0.0, %v1421
      %v1423 = vpop.f32.mrf.mxu0
      %v1424 = vadd.f32 0.0, %v1423
      %1425 = vdwg.mxu0
      %v1426 = vadd.f32 %v1361, %v1394
      %v1427 = vadd.f32 %v1362, %v1408
      %v1428 = vadd.f32 %v1363, %v1422
      %v1429 = vadd.f32 %v1364, %v1396
      %v1430 = vadd.f32 %v1365, %v1410
      %v1431 = vadd.f32 %v1366, %v1424
      %1432 = vrot.lane.b32.xlu0 %v994, 91
      %v1433 = vpop.permute.xlu0 %1432
      %1434 = vrot.lane.b32.xlu0 %v995, 91
      %v1435 = vpop.permute.xlu0 %1434
      %1436 = vrot.lane.b32.xlu0 %v996, 91
      %v1437 = vpop.permute.xlu0 %1436
      %v1438 = vsel %vm691, %v1433, %v1435
      %v1439 = vsel %vm691, %v1435, %v1437
      %v1441 = vsel %vm199, %v1438, 0
      %v1444 = vsel %vm199, %v1439, 0
      %v1447 = vsel %vm199, %v1437, 0
      %1449 = vmatpush.bf16.msra.mxu0 0
      %1450 = vmatpush.bf16.msra.mxu0 0
      %1451 = vmatpush.bf16.msra.mxu0 0
      %1452 = vmatpush.bf16.msra.mxu0 0
      %1453 = vmatpush.bf16.msra.mxu0 0
      %1454 = vmatpush.bf16.msra.mxu0 0
      %1455 = vmatpush.bf16.msra.mxu0 0
      %1456 = vmatpush.bf16.msra.mxu0 %v1441
      %1457 = vmatmul.bf16.gmra.mxu0 %v695
      %v1458 = vpop.f32.mrf.mxu0
      %v1459 = vadd.f32 0.0, %v1458
      %v1460 = vpop.f32.mrf.mxu0
      %v1461 = vadd.f32 0.0, %v1460
      %1462 = vdwg.mxu0
      %1463 = vmatpush.bf16.msra.mxu0 0
      %1464 = vmatpush.bf16.msra.mxu0 0
      %1465 = vmatpush.bf16.msra.mxu0 0
      %1466 = vmatpush.bf16.msra.mxu0 0
      %1467 = vmatpush.bf16.msra.mxu0 0
      %1468 = vmatpush.bf16.msra.mxu0 0
      %1469 = vmatpush.bf16.msra.mxu0 0
      %1470 = vmatpush.bf16.msra.mxu0 %v1444
      %1471 = vmatmul.bf16.gmra.mxu0 %v695
      %v1472 = vpop.f32.mrf.mxu0
      %v1473 = vadd.f32 0.0, %v1472
      %v1474 = vpop.f32.mrf.mxu0
      %v1475 = vadd.f32 0.0, %v1474
      %1476 = vdwg.mxu0
      %1477 = vmatpush.bf16.msra.mxu0 0
      %1478 = vmatpush.bf16.msra.mxu0 0
      %1479 = vmatpush.bf16.msra.mxu0 0
      %1480 = vmatpush.bf16.msra.mxu0 0
      %1481 = vmatpush.bf16.msra.mxu0 0
      %1482 = vmatpush.bf16.msra.mxu0 0
      %1483 = vmatpush.bf16.msra.mxu0 0
      %1484 = vmatpush.bf16.msra.mxu0 %v1447
      %1485 = vmatmul.bf16.gmra.mxu0 %v695
      %v1486 = vpop.f32.mrf.mxu0
      %v1487 = vadd.f32 0.0, %v1486
      %v1488 = vpop.f32.mrf.mxu0
      %v1489 = vadd.f32 0.0, %v1488
      %1490 = vdwg.mxu0
      %v1491 = vadd.f32 %v1426, %v1459
      %v1492 = vadd.f32 %v1427, %v1473
      %v1493 = vadd.f32 %v1428, %v1487
      %v1494 = vadd.f32 %v1429, %v1461
      %v1495 = vadd.f32 %v1430, %v1475
      %v1496 = vadd.f32 %v1431, %v1489
      %1497 = vrot.lane.b32.xlu0 %v994, 90
      %v1498 = vpop.permute.xlu0 %1497
      %1499 = vrot.lane.b32.xlu0 %v995, 90
      %v1500 = vpop.permute.xlu0 %1499
      %1501 = vrot.lane.b32.xlu0 %v996, 90
      %v1502 = vpop.permute.xlu0 %1501
      %v1503 = vsel %vm765, %v1498, %v1500
      %v1504 = vsel %vm765, %v1500, %v1502
      %v1506 = vsel %vm199, %v1503, 0
      %v1509 = vsel %vm199, %v1504, 0
      %v1512 = vsel %vm199, %v1502, 0
      %1514 = vmatpush.bf16.msra.mxu0 0
      %1515 = vmatpush.bf16.msra.mxu0 0
      %1516 = vmatpush.bf16.msra.mxu0 0
      %1517 = vmatpush.bf16.msra.mxu0 0
      %1518 = vmatpush.bf16.msra.mxu0 0
      %1519 = vmatpush.bf16.msra.mxu0 0
      %1520 = vmatpush.bf16.msra.mxu0 0
      %1521 = vmatpush.bf16.msra.mxu0 %v1506
      %1522 = vmatmul.bf16.gmra.mxu0 %v769
      %v1523 = vpop.f32.mrf.mxu0
      %v1524 = vadd.f32 0.0, %v1523
      %v1525 = vpop.f32.mrf.mxu0
      %v1526 = vadd.f32 0.0, %v1525
      %1527 = vdwg.mxu0
      %1528 = vmatpush.bf16.msra.mxu0 0
      %1529 = vmatpush.bf16.msra.mxu0 0
      %1530 = vmatpush.bf16.msra.mxu0 0
      %1531 = vmatpush.bf16.msra.mxu0 0
      %1532 = vmatpush.bf16.msra.mxu0 0
      %1533 = vmatpush.bf16.msra.mxu0 0
      %1534 = vmatpush.bf16.msra.mxu0 0
      %1535 = vmatpush.bf16.msra.mxu0 %v1509
      %1536 = vmatmul.bf16.gmra.mxu0 %v769
      %v1537 = vpop.f32.mrf.mxu0
      %v1538 = vadd.f32 0.0, %v1537
      %v1539 = vpop.f32.mrf.mxu0
      %v1540 = vadd.f32 0.0, %v1539
      %1541 = vdwg.mxu0
      %1542 = vmatpush.bf16.msra.mxu0 0
      %1543 = vmatpush.bf16.msra.mxu0 0
      %1544 = vmatpush.bf16.msra.mxu0 0
      %1545 = vmatpush.bf16.msra.mxu0 0
      %1546 = vmatpush.bf16.msra.mxu0 0
      %1547 = vmatpush.bf16.msra.mxu0 0
      %1548 = vmatpush.bf16.msra.mxu0 0
      %1549 = vmatpush.bf16.msra.mxu0 %v1512
      %1550 = vmatmul.bf16.gmra.mxu0 %v769
      %v1551 = vpop.f32.mrf.mxu0
      %v1552 = vadd.f32 0.0, %v1551
      %v1553 = vpop.f32.mrf.mxu0
      %v1554 = vadd.f32 0.0, %v1553
      %1555 = vdwg.mxu0
      %v1556 = vadd.f32 %v1491, %v1524
      %v1557 = vadd.f32 %v1492, %v1538
      %v1558 = vadd.f32 %v1493, %v1552
      %v1559 = vadd.f32 %v1494, %v1526
      %v1560 = vadd.f32 %v1495, %v1540
      %v1561 = vadd.f32 %v1496, %v1554
      %1564 = vrot.lane.b32.xlu0 %v1556, 126
      %v1565 = vpop.permute.xlu0 %1564
      %1566 = vrot.lane.b32.xlu0 %v1559, 126
      %v1567 = vpop.permute.xlu0 %1566
      %1570 = vrot.lane.b32.xlu0 %v1556, 124
      %v1571 = vpop.permute.xlu0 %1570
      %1572 = vrot.lane.b32.xlu0 %v1559, 124
      %v1573 = vpop.permute.xlu0 %1572
      %1576 = vrot.lane.b32.xlu0 %v1556, 122
      %v1577 = vpop.permute.xlu0 %1576
      %1578 = vrot.lane.b32.xlu0 %v1559, 122
      %v1579 = vpop.permute.xlu0 %1578
      %1582 = vrot.lane.b32.xlu0 %v1556, 120
      %v1583 = vpop.permute.xlu0 %1582
      %1584 = vrot.lane.b32.xlu0 %v1559, 120
      %v1585 = vpop.permute.xlu0 %1584
      %1588 = vrot.lane.b32.xlu0 %v1556, 118
      %v1589 = vpop.permute.xlu0 %1588
      %1590 = vrot.lane.b32.xlu0 %v1559, 118
      %v1591 = vpop.permute.xlu0 %1590
      %1594 = vrot.lane.b32.xlu0 %v1556, 116
      %v1595 = vpop.permute.xlu0 %1594
      %1596 = vrot.lane.b32.xlu0 %v1559, 116
      %v1597 = vpop.permute.xlu0 %1596
      %1602 = vrot.lane.b32.xlu0 %v1556, 114
      %v1603 = vpop.permute.xlu0 %1602
      %1604 = vrot.lane.b32.xlu0 %v1557, 114
      %v1605 = vpop.permute.xlu0 %1604
      %1606 = vrot.lane.b32.xlu0 %v1559, 114
      %v1607 = vpop.permute.xlu0 %1606
      %1608 = vrot.lane.b32.xlu0 %v1560, 114
      %v1609 = vpop.permute.xlu0 %1608
      %v1610 = vsel %vm876, %v1603, %v1605
      %v1611 = vsel %vm876, %v1607, %v1609
      %1614 = vrot.lane.b32.xlu0 %v1557, 112
      %v1615 = vpop.permute.xlu0 %1614
      %1616 = vrot.lane.b32.xlu0 %v1560, 112
      %v1617 = vpop.permute.xlu0 %1616
      %1620 = vrot.lane.b32.xlu0 %v1557, 110
      %v1621 = vpop.permute.xlu0 %1620
      %1622 = vrot.lane.b32.xlu0 %v1560, 110
      %v1623 = vpop.permute.xlu0 %1622
      %1626 = vrot.lane.b32.xlu0 %v1557, 108
      %v1627 = vpop.permute.xlu0 %1626
      %1628 = vrot.lane.b32.xlu0 %v1560, 108
      %v1629 = vpop.permute.xlu0 %1628
      %1632 = vrot.lane.b32.xlu0 %v1557, 106
      %v1633 = vpop.permute.xlu0 %1632
      %1634 = vrot.lane.b32.xlu0 %v1560, 106
      %v1635 = vpop.permute.xlu0 %1634
      %1638 = vrot.lane.b32.xlu0 %v1557, 104
      %v1639 = vpop.permute.xlu0 %1638
      %1640 = vrot.lane.b32.xlu0 %v1560, 104
      %v1641 = vpop.permute.xlu0 %1640
      %1644 = vrot.lane.b32.xlu0 %v1557, 102
      %v1645 = vpop.permute.xlu0 %1644
      %1646 = vrot.lane.b32.xlu0 %v1560, 102
      %v1647 = vpop.permute.xlu0 %1646
      %1652 = vrot.lane.b32.xlu0 %v1557, 100
      %v1653 = vpop.permute.xlu0 %1652
      %1654 = vrot.lane.b32.xlu0 %v1558, 100
      %v1655 = vpop.permute.xlu0 %1654
      %1656 = vrot.lane.b32.xlu0 %v1560, 100
      %v1657 = vpop.permute.xlu0 %1656
      %1658 = vrot.lane.b32.xlu0 %v1561, 100
      %v1659 = vpop.permute.xlu0 %1658
      %v1660 = vsel %vm927, %v1653, %v1655
      %v1661 = vsel %vm927, %v1657, %v1659
      %1664 = vrot.lane.b32.xlu0 %v1558, 98
      %v1665 = vpop.permute.xlu0 %1664
      %1666 = vrot.lane.b32.xlu0 %v1561, 98
      %v1667 = vpop.permute.xlu0 %1666
      %v1670 = vsel %vm938, %v1556, %v1565
      %v1671 = vsel %vm938, %v1559, %v1567
      %v1672 = vsel %vm941, %v1670, %v1571
      %v1673 = vsel %vm941, %v1671, %v1573
      %v1674 = vsel %vm944, %v1672, %v1577
      %v1675 = vsel %vm944, %v1673, %v1579
      %v1676 = vsel %vm947, %v1674, %v1583
      %v1677 = vsel %vm947, %v1675, %v1585
      %v1678 = vsel %vm950, %v1676, %v1589
      %v1679 = vsel %vm950, %v1677, %v1591
      %v1680 = vsel %vm953, %v1678, %v1595
      %v1681 = vsel %vm953, %v1679, %v1597
      %v1682 = vsel %vm956, %v1680, %v1610
      %v1683 = vsel %vm956, %v1681, %v1611
      %v1684 = vsel %vm938, %v1615, %v1621
      %v1685 = vsel %vm938, %v1617, %v1623
      %v1686 = vsel %vm941, %v1684, %v1627
      %v1687 = vsel %vm941, %v1685, %v1629
      %v1688 = vsel %vm944, %v1686, %v1633
      %v1689 = vsel %vm944, %v1687, %v1635
      %v1690 = vsel %vm947, %v1688, %v1639
      %v1691 = vsel %vm947, %v1689, %v1641
      %v1692 = vsel %vm950, %v1690, %v1645
      %v1693 = vsel %vm950, %v1691, %v1647
      %v1694 = vsel %vm953, %v1692, %v1660
      %v1695 = vsel %vm953, %v1693, %v1661
      %v1696 = vsel %vm956, %v1694, %v1665
      %v1697 = vsel %vm956, %v1695, %v1667
      %v1698 = vpack.c.bf16 %v1696, %v1682
      %v1699 = vpack.c.bf16 %v1697, %v1683
      %s1700 = scalar_lea.vmem %s150, 16
      %1701 = vst [vmem:[%s1700] sm:$0xff] %v1698
      %v1702 = vld [vmem:[%s1700 + $0x8] sm:$0x11]
      %v1703 = vsel %vm982, %v1699, %v1702
      %1704 = vst [vmem:[%s1700 + $0x8] sm:$0x11] %v1703
      %s1705 = smul.u32 2, %s13
      %p1706 = scmp.lt.s32.totalorder %s1705, 7
      %s1707 = scalar_select %p1706, %s1705, 7
      %s1708 = smul.addr %s1707, 4
      %s1709 = smul.addr %s1708, 4
      %s1710 = scalar_lea.vmem %s2, %s1709
      // Predicated region
      $region29: #{forward.1} parent=27 // pred_check
        %p1711 = pneg %p78
      $region30: #{forward.1} parent=27 // pred_check_branch
        %1713 = sbr.rel (%p1711) target = $region32
      $region31: #{forward.1} parent=27 // pred_region
        %s1714 = smul.u32 2, %s13
      $region32: #{forward.1} parent=27 // pred_fallthru
        _
    $region28: #{forward.1} parent=5 // pred_fallthru
      _
    %p1715 = scmp.le.s32.totalorder 2, %s8
    // Predicated region
    $region33: #{forward.1} parent=5 // pred_check
      %p1716 = pneg %p1715
    $region34: #{forward.1} parent=5 // pred_check_branch
      %1718 = sbr.rel (%p1716) target = $region36
    $region35: #{forward.1} parent=5 // pred_region
      %s1719 = ssub.s32 %s8, 2
      // Predicated region
      $region37: #{forward.1} parent=35 // pred_check
        %p1720 = pneg %p84
      $region38: #{forward.1} parent=35 // pred_check_branch
        %1722 = sbr.rel (%p1720) target = $region40
      $region39: #{forward.1} parent=35 // pred_region
        %s1723 = smul.u32 2, %s14
        %p1724 = scmp.lt.s32.totalorder %s1723, 7
        %s1725 = scalar_select %p1724, %s1723, 7
        %s1726 = smul.addr %s1725, 4
        %s1727 = smul.addr %s1726, 4
        %s1728 = scalar_lea.vmem %s2, %s1727
      $region40: #{forward.1} parent=35 // pred_fallthru
        _
    $region36: #{forward.1} parent=5 // pred_fallthru
      _
  $region6: #{forward.1} parent=0 // loop_footer
    %s12 = sadd.s32 1, %s8
  $region7: #{forward.1} parent=0 // loop_footer_branch
    %7 = sbr.rel target = $region3
  $region8: #{forward.1} parent=0 // loop_exit
    _

</llo_original>
